<compile_context>
chip_gen: v5e
topology: v5e:2x2
jax: 0.10.0
libtpu: 0.0.40
codegen_flags: <defaults>
</compile_context>

<pallas_src>
import jax
import jax.numpy as jnp
import numpy as np
from jax.experimental import pallas as pl
from jax.experimental.pallas import tpu as pltpu

EPS = 1e-5  # PyTorch GroupNorm default eps


def interact_module(feat1, feat2, conv_w, gamma, beta, num_groups=32):
    """Pallas implementation of InteractModule.forward (NCHW in / NCHW out)."""
    x = jnp.concatenate([feat1, feat2], axis=1)          # (N, Cin, H, W)
    N, Cin, H, W = x.shape
    Cout, Cin_w, KH, KW = conv_w.shape
    assert Cin_w == Cin and (KH, KW) == (3, 3)
    assert Cout % num_groups == 0
    chs = Cout // num_groups

    Ho, Wo = H - (KH - 1), W - (KW - 1)
    Hf = H * W                      # flattened input spatial size per sample
    Pq = (Ho - 1) * W + Wo          # flat conv-output span per sample (has W-Wo junk cols/row)
    K = KH * KW * Cin               # im2col contraction size

    # Batch block: smallest divisor of N making the lane dim >= 128 (lane-dense
    # stores).  If Pq >= 128 already, NB stays 1 and the parallel batch axis
    # keeps >1 grid steps for v7x's two TensorCores.
    NB = N
    for d in range(1, N + 1):
        if N % d == 0 and d * Pq >= 128:
            NB = d
            break
    NBLK = N // NB
    L = NB * Pq                     # lanes per grid step

    # ---- wrapper-side layout glue (O(input) bytes, no 9x im2col blow-up) ----
    x_flat = x.astype(jnp.bfloat16).reshape(N, Cin, Hf)
    # weight flattened with (ky, kx) outer / ci inner to match in-kernel patch order
    w2d = conv_w.transpose(0, 2, 3, 1).reshape(Cout, K).astype(jnp.bfloat16)

    # Per-sample valid-lane selection matrix: S[j, n] = 1 iff lane j belongs to
    # sample n of the block AND is a valid (non-wrapped) conv column.
    j = np.arange(L)
    owner = j // Pq
    q = j - owner * Pq
    valid = (q % W) < Wo
    sel_np = ((owner[:, None] == np.arange(NB)[None, :]) & valid[:, None]).astype(np.float32)
    exp_np = (owner[None, :] == np.arange(NB)[:, None]).astype(np.float32)   # (NB, L)
    sel = jnp.asarray(sel_np)
    exp = jnp.asarray(exp_np)

    # Group-membership matrix scaled so memb @ per-channel-sums = group mean.
    gid = np.arange(Cout) // chs
    memb = jnp.asarray(
        (gid[:, None] == gid[None, :]).astype(np.float32) / float(chs * Ho * Wo))

    gamma2 = gamma.reshape(Cout, 1).astype(jnp.float32)
    beta2 = beta.reshape(Cout, 1).astype(jnp.float32)

    taps = [(ky, kx) for ky in range(KH) for kx in range(KW)]

    def kernel(x_ref, w_ref, sel_ref, exp_ref, memb_ref, gamma_ref, beta_ref, out_ref):
        # ---- in-kernel im2col: 9 statically shifted lane slices per sample ----
        per_sample = []
        for n in range(NB):
            xn = x_ref[n]                                            # (Cin, Hf) bf16
            cols = [xn[:, ky * W + kx: ky * W + kx + Pq] for (ky, kx) in taps]
            per_sample.append(jnp.concatenate(cols, axis=0))         # (K, Pq)
        patches = (per_sample[0] if NB == 1
                   else jnp.concatenate(per_sample, axis=1))         # (K, L) bf16

        # ---- conv as one bf16 matmul with f32 accumulation (hot path) ----
        y = jnp.dot(w_ref[...], patches,
                    preferred_element_type=jnp.float32)              # (Cout, L) f32

        # ---- GroupNorm statistics via tiny matmuls (per channel, per sample) ----
        s = sel_ref[...]
        s1 = jnp.dot(y, s, preferred_element_type=jnp.float32)       # (Cout, NB) valid sums
        s2 = jnp.dot(y * y, s, preferred_element_type=jnp.float32)   # (Cout, NB)
        mean = jnp.dot(memb_ref[...], s1,
                       preferred_element_type=jnp.float32)           # group mean per channel
        ex2 = jnp.dot(memb_ref[...], s2,
                      preferred_element_type=jnp.float32)            # group E[y^2]
        var = jnp.maximum(ex2 - mean * mean, 0.0)                    # clamp: no NaN from rsqrt
        inv = jax.lax.rsqrt(var + EPS)                               # (Cout, NB), f32

        # fold GroupNorm affine into per-(channel, sample) scale/shift, then
        # expand to lanes with a contraction-NB matmul (keeps everything 2-D).
        scale = gamma_ref[...] * inv                                 # (Cout, NB)
        shift = beta_ref[...] - scale * mean                         # (Cout, NB)
        scale_l = jnp.dot(scale, exp_ref[...],
                          preferred_element_type=jnp.float32)        # (Cout, L)
        shift_l = jnp.dot(shift, exp_ref[...],
                          preferred_element_type=jnp.float32)        # (Cout, L)

        out_ref[0] = (1.0 + jnp.tanh(y * scale_l + shift_l)).astype(out_ref.dtype)

    out = pl.pallas_call(
        kernel,
        out_shape=jax.ShapeDtypeStruct((NBLK, Cout, L), jnp.float32),
        grid=(NBLK,),
        in_specs=[
            pl.BlockSpec((NB, Cin, Hf), lambda bb: (bb, 0, 0)),   # x (flattened spatial)
            pl.BlockSpec((Cout, K), lambda bb: (0, 0)),           # flattened conv weight
            pl.BlockSpec((L, NB), lambda bb: (0, 0)),             # valid-lane selector
            pl.BlockSpec((NB, L), lambda bb: (0, 0)),             # sample -> lane expander
            pl.BlockSpec((Cout, Cout), lambda bb: (0, 0)),        # group membership / scale
            pl.BlockSpec((Cout, 1), lambda bb: (0, 0)),           # gamma
            pl.BlockSpec((Cout, 1), lambda bb: (0, 0)),           # beta
        ],
        out_specs=pl.BlockSpec((1, Cout, L), lambda bb: (bb, 0, 0)),
        compiler_params=pltpu.CompilerParams(dimension_semantics=("parallel",)),
    )(x_flat, w2d, sel, exp, memb, gamma2, beta2)

    # ---- wrapper-side un-flatten (pure layout plumbing) ----
    out = out.reshape(NBLK, Cout, NB, Pq).transpose(0, 2, 1, 3).reshape(N, Cout, Pq)
    out = jnp.pad(out, ((0, 0), (0, 0), (0, Ho * W - Pq)))
    out = out.reshape(N, Cout, Ho, W)[:, :, :, :Wo]
    return out


def reference(feat1, feat2, conv_w, gamma, beta, num_groups=32):
    """Pure-JAX f32 reference mirroring the PyTorch module."""
    x = jnp.concatenate([feat1, feat2], axis=1).astype(jnp.float32)
    y = jax.lax.conv_general_dilated(
        x, conv_w.astype(jnp.float32), (1, 1), 'VALID',
        dimension_numbers=('NCHW', 'OIHW', 'NCHW'),
        precision=jax.lax.Precision.HIGHEST)
    N, C, Ho, Wo = y.shape
    chs = C // num_groups
    yg = y.reshape(N, num_groups, chs, Ho, Wo)
    mean = yg.mean(axis=(2, 3, 4), keepdims=True)
    var = ((yg - mean) ** 2).mean(axis=(2, 3, 4), keepdims=True)
    yn = ((yg - mean) / jnp.sqrt(var + EPS)).reshape(N, C, Ho, Wo)
    return 1.0 + jnp.tanh(yn * gamma.reshape(1, C, 1, 1) + beta.reshape(1, C, 1, 1))


if __name__ == "__main__":
    # planes=32 -> 2*planes=64 channels with 32 groups => 2 channels per group,
    # so the group-reduction path (chs > 1) is actually exercised.
    planes = 32
    N, H, W = 2, 10, 10
    Cio = 2 * planes

    key = jax.random.PRNGKey(0)
    k1, k2, k3, k4, k5 = jax.random.split(key, 5)
    feat1 = jax.random.normal(k1, (N, planes, H, W), dtype=jnp.float32)
    feat2 = jax.random.normal(k2, (N, planes, H, W), dtype=jnp.float32)
    conv_w = 0.05 * jax.random.normal(k3, (Cio, Cio, 3, 3), dtype=jnp.float32)
    gamma = 1.0 + 0.1 * jax.random.normal(k4, (Cio,), dtype=jnp.float32)
    beta = 0.1 * jax.random.normal(k5, (Cio,), dtype=jnp.float32)

    out = jax.block_until_ready(interact_module(feat1, feat2, conv_w, gamma, beta))
    ref = reference(feat1, feat2, conv_w, gamma, beta)

    assert out.shape == (N, Cio, H - 2, W - 2), out.shape
    max_err = float(jnp.max(jnp.abs(out - ref)))
    # bf16 matmul inputs with f32 accumulation: slightly looser than the f32 reference.
    assert jnp.allclose(out, ref, atol=3e-2, rtol=3e-2), max_err

    print("KERNEL_OK")
</pallas_src>

<mosaic_0001>
module attributes {stable_mosaic.version = 11 : i64} {
  func.func @kernel(%arg0: i32, %arg1: memref<2x64x100xbf16, #tpu.memory_space<vmem>>, %arg2: memref<64x576xbf16, #tpu.memory_space<vmem>>, %arg3: memref<156x2xf32, #tpu.memory_space<vmem>>, %arg4: memref<2x156xf32, #tpu.memory_space<vmem>>, %arg5: memref<64x64xf32, #tpu.memory_space<vmem>>, %arg6: memref<64x1xf32, #tpu.memory_space<vmem>>, %arg7: memref<64x1xf32, #tpu.memory_space<vmem>>, %arg8: memref<1x64x156xf32, #tpu.memory_space<vmem>>) attributes {dimension_semantics = [#tpu.dimension_semantics<parallel>], iteration_bounds = array<i64: 1>, scalar_prefetch = 0 : i64, scratch_operands = 0 : i64, tpu.core_type = #tpu.core_type<tc>, window_params = [{transform_indices = @transform_0, window_bounds = array<i64: 2, 64, 100>}, {pipeline_mode = #tpu.pipeline_mode<synchronous>, transform_indices = @transform_1, window_bounds = array<i64: 64, 576>}, {pipeline_mode = #tpu.pipeline_mode<synchronous>, transform_indices = @transform_2, window_bounds = array<i64: 156, 2>}, {pipeline_mode = #tpu.pipeline_mode<synchronous>, transform_indices = @transform_3, window_bounds = array<i64: 2, 156>}, {pipeline_mode = #tpu.pipeline_mode<synchronous>, transform_indices = @transform_4, window_bounds = array<i64: 64, 64>}, {pipeline_mode = #tpu.pipeline_mode<synchronous>, transform_indices = @transform_5, window_bounds = array<i64: 64, 1>}, {pipeline_mode = #tpu.pipeline_mode<synchronous>, transform_indices = @transform_6, window_bounds = array<i64: 64, 1>}, {transform_indices = @transform_7, window_bounds = array<i64: 1, 64, 156>}]} {
    %c0 = arith.constant 0 : index
    %c0_0 = arith.constant 0 : index
    %c0_1 = arith.constant 0 : index
    %0 = vector.load %arg1[%c0, %c0_0, %c0_1] : memref<2x64x100xbf16, #tpu.memory_space<vmem>>, vector<1x64x100xbf16>
    %1 = vector.shape_cast %0 : vector<1x64x100xbf16> to vector<64x100xbf16>
    %2 = vector.extract_strided_slice %1 {offsets = [0, 0], sizes = [64, 78], strides = [1, 1]} : vector<64x100xbf16> to vector<64x78xbf16>
    %3 = vector.extract_strided_slice %1 {offsets = [0, 1], sizes = [64, 78], strides = [1, 1]} : vector<64x100xbf16> to vector<64x78xbf16>
    %4 = vector.extract_strided_slice %1 {offsets = [0, 2], sizes = [64, 78], strides = [1, 1]} : vector<64x100xbf16> to vector<64x78xbf16>
    %5 = vector.extract_strided_slice %1 {offsets = [0, 10], sizes = [64, 78], strides = [1, 1]} : vector<64x100xbf16> to vector<64x78xbf16>
    %6 = vector.extract_strided_slice %1 {offsets = [0, 11], sizes = [64, 78], strides = [1, 1]} : vector<64x100xbf16> to vector<64x78xbf16>
    %7 = vector.extract_strided_slice %1 {offsets = [0, 12], sizes = [64, 78], strides = [1, 1]} : vector<64x100xbf16> to vector<64x78xbf16>
    %8 = vector.extract_strided_slice %1 {offsets = [0, 20], sizes = [64, 78], strides = [1, 1]} : vector<64x100xbf16> to vector<64x78xbf16>
    %9 = vector.extract_strided_slice %1 {offsets = [0, 21], sizes = [64, 78], strides = [1, 1]} : vector<64x100xbf16> to vector<64x78xbf16>
    %10 = vector.extract_strided_slice %1 {offsets = [0, 22], sizes = [64, 78], strides = [1, 1]} : vector<64x100xbf16> to vector<64x78xbf16>
    %11 = tpu.concatenate %2, %3, %4, %5, %6, %7, %8, %9, %10 in 0 : vector<64x78xbf16>, vector<64x78xbf16>, vector<64x78xbf16>, vector<64x78xbf16>, vector<64x78xbf16>, vector<64x78xbf16>, vector<64x78xbf16>, vector<64x78xbf16>, vector<64x78xbf16> -> vector<576x78xbf16>
    %c1 = arith.constant 1 : index
    %c0_2 = arith.constant 0 : index
    %c0_3 = arith.constant 0 : index
    %12 = vector.load %arg1[%c1, %c0_2, %c0_3] : memref<2x64x100xbf16, #tpu.memory_space<vmem>>, vector<1x64x100xbf16>
    %13 = vector.shape_cast %12 : vector<1x64x100xbf16> to vector<64x100xbf16>
    %14 = vector.extract_strided_slice %13 {offsets = [0, 0], sizes = [64, 78], strides = [1, 1]} : vector<64x100xbf16> to vector<64x78xbf16>
    %15 = vector.extract_strided_slice %13 {offsets = [0, 1], sizes = [64, 78], strides = [1, 1]} : vector<64x100xbf16> to vector<64x78xbf16>
    %16 = vector.extract_strided_slice %13 {offsets = [0, 2], sizes = [64, 78], strides = [1, 1]} : vector<64x100xbf16> to vector<64x78xbf16>
    %17 = vector.extract_strided_slice %13 {offsets = [0, 10], sizes = [64, 78], strides = [1, 1]} : vector<64x100xbf16> to vector<64x78xbf16>
    %18 = vector.extract_strided_slice %13 {offsets = [0, 11], sizes = [64, 78], strides = [1, 1]} : vector<64x100xbf16> to vector<64x78xbf16>
    %19 = vector.extract_strided_slice %13 {offsets = [0, 12], sizes = [64, 78], strides = [1, 1]} : vector<64x100xbf16> to vector<64x78xbf16>
    %20 = vector.extract_strided_slice %13 {offsets = [0, 20], sizes = [64, 78], strides = [1, 1]} : vector<64x100xbf16> to vector<64x78xbf16>
    %21 = vector.extract_strided_slice %13 {offsets = [0, 21], sizes = [64, 78], strides = [1, 1]} : vector<64x100xbf16> to vector<64x78xbf16>
    %22 = vector.extract_strided_slice %13 {offsets = [0, 22], sizes = [64, 78], strides = [1, 1]} : vector<64x100xbf16> to vector<64x78xbf16>
    %23 = tpu.concatenate %14, %15, %16, %17, %18, %19, %20, %21, %22 in 0 : vector<64x78xbf16>, vector<64x78xbf16>, vector<64x78xbf16>, vector<64x78xbf16>, vector<64x78xbf16>, vector<64x78xbf16>, vector<64x78xbf16>, vector<64x78xbf16>, vector<64x78xbf16> -> vector<576x78xbf16>
    %24 = tpu.concatenate %11, %23 in 1 : vector<576x78xbf16>, vector<576x78xbf16> -> vector<576x156xbf16>
    %c0_4 = arith.constant 0 : index
    %c0_5 = arith.constant 0 : index
    %25 = vector.load %arg2[%c0_4, %c0_5] : memref<64x576xbf16, #tpu.memory_space<vmem>>, vector<64x576xbf16>
    %cst = arith.constant dense<0.000000e+00> : vector<64x156xf32>
    %26 = tpu.matmul %25, %24, %cst {dimension_numbers = #tpu.dot_dimension_numbers<[1], [0], [0], [1], [0, 0, 1, 1], [], []>} : vector<64x576xbf16>, vector<576x156xbf16>, vector<64x156xf32> -> vector<64x156xf32>
    %c0_6 = arith.constant 0 : index
    %c0_7 = arith.constant 0 : index
    %27 = vector.load %arg3[%c0_6, %c0_7] : memref<156x2xf32, #tpu.memory_space<vmem>>, vector<156x2xf32>
    %cst_8 = arith.constant dense<0.000000e+00> : vector<64x2xf32>
    %28 = tpu.matmul %26, %27, %cst_8 {dimension_numbers = #tpu.dot_dimension_numbers<[1], [0], [0], [1], [0, 0, 1, 1], [], []>} : vector<64x156xf32>, vector<156x2xf32>, vector<64x2xf32> -> vector<64x2xf32>
    %29 = arith.mulf %26, %26 : vector<64x156xf32>
    %cst_9 = arith.constant dense<0.000000e+00> : vector<64x2xf32>
    %30 = tpu.matmul %29, %27, %cst_9 {dimension_numbers = #tpu.dot_dimension_numbers<[1], [0], [0], [1], [0, 0, 1, 1], [], []>} : vector<64x156xf32>, vector<156x2xf32>, vector<64x2xf32> -> vector<64x2xf32>
    %c0_10 = arith.constant 0 : index
    %c0_11 = arith.constant 0 : index
    %31 = vector.load %arg5[%c0_10, %c0_11] : memref<64x64xf32, #tpu.memory_space<vmem>>, vector<64x64xf32>
    %cst_12 = arith.constant dense<0.000000e+00> : vector<64x2xf32>
    %32 = tpu.matmul %31, %28, %cst_12 {dimension_numbers = #tpu.dot_dimension_numbers<[1], [0], [0], [1], [0, 0, 1, 1], [], []>} : vector<64x64xf32>, vector<64x2xf32>, vector<64x2xf32> -> vector<64x2xf32>
    %c0_13 = arith.constant 0 : index
    %c0_14 = arith.constant 0 : index
    %33 = vector.load %arg5[%c0_13, %c0_14] : memref<64x64xf32, #tpu.memory_space<vmem>>, vector<64x64xf32>
    %cst_15 = arith.constant dense<0.000000e+00> : vector<64x2xf32>
    %34 = tpu.matmul %33, %30, %cst_15 {dimension_numbers = #tpu.dot_dimension_numbers<[1], [0], [0], [1], [0, 0, 1, 1], [], []>} : vector<64x64xf32>, vector<64x2xf32>, vector<64x2xf32> -> vector<64x2xf32>
    %35 = arith.mulf %32, %32 : vector<64x2xf32>
    %36 = arith.subf %34, %35 : vector<64x2xf32>
    %cst_16 = arith.constant 0.000000e+00 : f32
    %37 = vector.broadcast %cst_16 : f32 to vector<64x2xf32>
    %38 = arith.maximumf %36, %37 : vector<64x2xf32>
    %cst_17 = arith.constant 9.99999974E-6 : f32
    %39 = vector.broadcast %cst_17 : f32 to vector<64x2xf32>
    %40 = arith.addf %38, %39 : vector<64x2xf32>
    %41 = math.rsqrt %40 : vector<64x2xf32>
    %c0_18 = arith.constant 0 : index
    %c0_19 = arith.constant 0 : index
    %42 = vector.load %arg6[%c0_18, %c0_19] : memref<64x1xf32, #tpu.memory_space<vmem>>, vector<64x1xf32>
    %43 = vector.broadcast %42 : vector<64x1xf32> to vector<64x2xf32>
    %44 = arith.mulf %43, %41 : vector<64x2xf32>
    %c0_20 = arith.constant 0 : index
    %c0_21 = arith.constant 0 : index
    %45 = vector.load %arg7[%c0_20, %c0_21] : memref<64x1xf32, #tpu.memory_space<vmem>>, vector<64x1xf32>
    %46 = arith.mulf %44, %32 : vector<64x2xf32>
    %47 = vector.broadcast %45 : vector<64x1xf32> to vector<64x2xf32>
    %48 = arith.subf %47, %46 : vector<64x2xf32>
    %c0_22 = arith.constant 0 : index
    %c0_23 = arith.constant 0 : index
    %49 = vector.load %arg4[%c0_22, %c0_23] : memref<2x156xf32, #tpu.memory_space<vmem>>, vector<2x156xf32>
    %cst_24 = arith.constant dense<0.000000e+00> : vector<64x156xf32>
    %50 = tpu.matmul %44, %49, %cst_24 {dimension_numbers = #tpu.dot_dimension_numbers<[1], [0], [0], [1], [0, 0, 1, 1], [], []>} : vector<64x2xf32>, vector<2x156xf32>, vector<64x156xf32> -> vector<64x156xf32>
    %c0_25 = arith.constant 0 : index
    %c0_26 = arith.constant 0 : index
    %51 = vector.load %arg4[%c0_25, %c0_26] : memref<2x156xf32, #tpu.memory_space<vmem>>, vector<2x156xf32>
    %cst_27 = arith.constant dense<0.000000e+00> : vector<64x156xf32>
    %52 = tpu.matmul %48, %51, %cst_27 {dimension_numbers = #tpu.dot_dimension_numbers<[1], [0], [0], [1], [0, 0, 1, 1], [], []>} : vector<64x2xf32>, vector<2x156xf32>, vector<64x156xf32> -> vector<64x156xf32>
    %53 = arith.mulf %26, %50 : vector<64x156xf32>
    %54 = arith.addf %53, %52 : vector<64x156xf32>
    %55 = math.tanh %54 : vector<64x156xf32>
    %cst_28 = arith.constant 1.000000e+00 : f32
    %56 = vector.broadcast %cst_28 : f32 to vector<64x156xf32>
    %57 = arith.addf %56, %55 : vector<64x156xf32>
    %c0_29 = arith.constant 0 : index
    %c0_30 = arith.constant 0 : index
    %c0_31 = arith.constant 0 : index
    %58 = vector.load %arg8[%c0_29, %c0_30, %c0_31] : memref<1x64x156xf32, #tpu.memory_space<vmem>>, vector<1x64x156xf32>
    %59 = vector.shape_cast %58 : vector<1x64x156xf32> to vector<64x156xf32>
    %60 = vector.shape_cast %57 : vector<64x156xf32> to vector<1x64x156xf32>
    tpu.vector_store %arg8[%c0_29, %c0_30, %c0_31], %60 {strides = array<i32>} : memref<1x64x156xf32, #tpu.memory_space<vmem>>, vector<1x64x156xf32>,
    return
  }
  func.func @transform_0(%arg0: i32) -> (i32, i32, i32) {
    %c0_i32 = arith.constant 0 : i32
    %c0_i32_0 = arith.constant 0 : i32
    %c0_i32_1 = arith.constant 0 : i32
    return %arg0, %c0_i32, %c0_i32_0 : i32, i32, i32
  }
  func.func @transform_1(%arg0: i32) -> (i32, i32) {
    %c0_i32 = arith.constant 0 : i32
    %c0_i32_0 = arith.constant 0 : i32
    %c0_i32_1 = arith.constant 0 : i32
    return %c0_i32, %c0_i32_0 : i32, i32
  }
  func.func @transform_2(%arg0: i32) -> (i32, i32) {
    %c0_i32 = arith.constant 0 : i32
    %c0_i32_0 = arith.constant 0 : i32
    %c0_i32_1 = arith.constant 0 : i32
    return %c0_i32, %c0_i32_0 : i32, i32
  }
  func.func @transform_3(%arg0: i32) -> (i32, i32) {
    %c0_i32 = arith.constant 0 : i32
    %c0_i32_0 = arith.constant 0 : i32
    %c0_i32_1 = arith.constant 0 : i32
    return %c0_i32, %c0_i32_0 : i32, i32
  }
  func.func @transform_4(%arg0: i32) -> (i32, i32) {
    %c0_i32 = arith.constant 0 : i32
    %c0_i32_0 = arith.constant 0 : i32
    %c0_i32_1 = arith.constant 0 : i32
    return %c0_i32, %c0_i32_0 : i32, i32
  }
  func.func @transform_5(%arg0: i32) -> (i32, i32) {
    %c0_i32 = arith.constant 0 : i32
    %c0_i32_0 = arith.constant 0 : i32
    %c0_i32_1 = arith.constant 0 : i32
    return %c0_i32, %c0_i32_0 : i32, i32
  }
  func.func @transform_6(%arg0: i32) -> (i32, i32) {
    %c0_i32 = arith.constant 0 : i32
    %c0_i32_0 = arith.constant 0 : i32
    %c0_i32_1 = arith.constant 0 : i32
    return %c0_i32, %c0_i32_0 : i32, i32
  }
  func.func @transform_7(%arg0: i32) -> (i32, i32, i32) {
    %c0_i32 = arith.constant 0 : i32
    %c0_i32_0 = arith.constant 0 : i32
    %c0_i32_1 = arith.constant 0 : i32
    return %arg0, %c0_i32, %c0_i32_0 : i32, i32, i32
  }
}

</mosaic_0001>

<llo_original>
// kernel: tpu_custom_call.1
$region0: #{tpu_custom_call.1}
  #allocation0 [shape = 'u32[]', space=smem, size = 0x4, offset = 0x4, fixed_abs, tag = 'smem constant byte address 0x4 - core index']
  #allocation1 [shape = 'u32[72,128]{1,0:T(1,128)}', space=vmem, size = 0x9000, scoped, tag = 'internal scratch']
  %s0 = inlined_call_operand.vmem [shape: bf16[2,64,100], index: 0, kind: input, shape index: {}]
  %s1 = inlined_call_operand.vmem [shape: bf16[64,576], index: 1, kind: input, shape index: {}]
  %s2 = inlined_call_operand.vmem [shape: f32[156,2], index: 2, kind: input, shape index: {}]
  %s3 = inlined_call_operand.hbm [shape: f32[2,156], index: 3, kind: input, shape index: {}]
  %s4 = inlined_call_operand.vmem [shape: f32[64,64], index: 4, kind: input, shape index: {}]
  %s5 = inlined_call_operand.vmem [shape: f32[64,1], index: 5, kind: input, shape index: {}]
  %s6 = inlined_call_operand.vmem [shape: f32[64,1], index: 6, kind: input, shape index: {}]
  %s7 = inlined_call_operand.hbm [shape: f32[1,64,156], index: 7, kind: output, shape index: {}]
  %s8 = sld [smem:[#allocation0]]
  $region42: #{tpu_custom_call.1} parent=0
    _
  %s10 = ssub.s32 1, %s8
  %s11 = scalar_select 0, %s10, %s8
  $region1: #{tpu_custom_call.1} parent=0
    #allocation2 [shape = 'u8[2048]{0}', space=vmem, size = 0x800, scoped, tag = 'input window, operand 3, single buffered']
    #allocation3 [shape = 's32[1]{0}', space=sflag, size = 0x4, scoped, tag = 'scoped memory for tpu_custom_call.1']
    #allocation4 [shape = 's32[1]{0}', space=sflag, size = 0x4, scoped, tag = 'scoped memory for tpu_custom_call.1']
    #allocation5 [shape = 'u8[65536]{0}', space=vmem, size = 0x10000, scoped, tag = 'output window, operand 0, single buffered']
    %12 = vsyncpa [#allocation3], 0
    %13 = vsyncpa [#allocation4], 0
    // Predicated region
    $region2: #{tpu_custom_call.1} parent=1 // pred_check
      _
    $region3: #{tpu_custom_call.1} parent=1 // pred_check_branch
      %15 = sbr.rel (0) target = $region5
    $region4: #{tpu_custom_call.1} parent=1 // pred_region
      _
    $region5: #{tpu_custom_call.1} parent=1 // pred_fallthru
      _
    // Predicated region
    $region6: #{tpu_custom_call.1} parent=1 // pred_check
      _
    $region7: #{tpu_custom_call.1} parent=1 // pred_check_branch
      %17 = sbr.rel (0) target = $region9
    $region8: #{tpu_custom_call.1} parent=1 // pred_region
      _
    $region9: #{tpu_custom_call.1} parent=1 // pred_fallthru
      _
    // Predicated region
    $region10: #{tpu_custom_call.1} parent=1 // pred_check
      _
    $region11: #{tpu_custom_call.1} parent=1 // pred_check_branch
      %19 = sbr.rel (0) target = $region13
    $region12: #{tpu_custom_call.1} parent=1 // pred_region
      _
    $region13: #{tpu_custom_call.1} parent=1 // pred_fallthru
      _
    // Predicated region
    $region14: #{tpu_custom_call.1} parent=1 // pred_check
      _
    $region15: #{tpu_custom_call.1} parent=1 // pred_check_branch
      %21 = sbr.rel (0) target = $region17
    $region16: #{tpu_custom_call.1} parent=1 // pred_region
      %23 = vsyncadd [#allocation3], 0
      %s25 = sshll.u32 %s3, 4
      %s26 = int_to_ptr.hbm [resolvable:$true] %s25
      %s27 = sshll.u32 [#allocation2], 4
      %s28 = int_to_ptr.vmem [resolvable:$true] %s27
      %30 = dma.hbm_to_vmem [thread:$0]  %s26, 64, %s28, [#allocation3]
    $region17: #{tpu_custom_call.1} parent=1 // pred_fallthru
      _
    // Predicated region
    $region18: #{tpu_custom_call.1} parent=1 // pred_check
      _
    $region19: #{tpu_custom_call.1} parent=1 // pred_check_branch
      %32 = sbr.rel (0) target = $region21
    $region20: #{tpu_custom_call.1} parent=1 // pred_region
      _
    $region21: #{tpu_custom_call.1} parent=1 // pred_fallthru
      _
    // Predicated region
    $region22: #{tpu_custom_call.1} parent=1 // pred_check
      _
    $region23: #{tpu_custom_call.1} parent=1 // pred_check_branch
      %34 = sbr.rel (0) target = $region25
    $region24: #{tpu_custom_call.1} parent=1 // pred_region
      _
    $region25: #{tpu_custom_call.1} parent=1 // pred_fallthru
      _
    // Predicated region
    $region26: #{tpu_custom_call.1} parent=1 // pred_check
      _
    $region27: #{tpu_custom_call.1} parent=1 // pred_check_branch
      %36 = sbr.rel (0) target = $region29
    $region28: #{tpu_custom_call.1} parent=1 // pred_region
      _
    $region29: #{tpu_custom_call.1} parent=1 // pred_fallthru
      _
    // Predicated region
    $region30: #{tpu_custom_call.1} parent=1 // pred_check
      _
    $region31: #{tpu_custom_call.1} parent=1 // pred_check_branch
      %38 = sbr.rel (0) target = $region33
    $region32: #{tpu_custom_call.1} parent=1 // pred_region
      %40 = dma.done [#allocation3], 64
    $region33: #{tpu_custom_call.1} parent=1 // pred_fallthru
      _
    %v42 = vld [vmem:[%s0] sm:$0xf]
    %v43 = vld [vmem:[%s0 + $0x4] sm:$0xf]
    %v44 = vld [vmem:[%s0 + $0x8] sm:$0xf]
    %v45 = vld [vmem:[%s0 + $0xc] sm:$0xf]
    %v46 = vld [vmem:[%s0 + $0x10] sm:$0xf]
    %v47 = vld [vmem:[%s0 + $0x14] sm:$0xf]
    %v48 = vld [vmem:[%s0 + $0x18] sm:$0xf]
    %v49 = vld [vmem:[%s0 + $0x1c] sm:$0xf]
    %v58 = vunpack.c.l.b16 %v42
    %v59 = vunpack.c.l.b16 %v43
    %v60 = vunpack.c.l.b16 %v44
    %v61 = vunpack.c.l.b16 %v45
    %v62 = vunpack.c.l.b16 %v46
    %v63 = vunpack.c.l.b16 %v47
    %v64 = vunpack.c.l.b16 %v48
    %v65 = vunpack.c.l.b16 %v49
    %v66 = vpack.c.b16 %v59, %v58
    %v67 = vpack.c.b16 %v61, %v60
    %v68 = vpack.c.b16 %v63, %v62
    %v69 = vpack.c.b16 %v65, %v64
    %70 = vrot.lane.b32.xlu0 %v66, 127
    %v71 = vpop.permute.xlu0 %70
    %72 = vrot.lane.b32.xlu0 %v67, 127
    %v73 = vpop.permute.xlu0 %72
    %74 = vrot.lane.b32.xlu0 %v68, 127
    %v75 = vpop.permute.xlu0 %74
    %76 = vrot.lane.b32.xlu0 %v69, 127
    %v77 = vpop.permute.xlu0 %76
    %78 = vrot.lane.b32.xlu0 %v66, 126
    %v79 = vpop.permute.xlu0 %78
    %80 = vrot.lane.b32.xlu0 %v67, 126
    %v81 = vpop.permute.xlu0 %80
    %82 = vrot.lane.b32.xlu0 %v68, 126
    %v83 = vpop.permute.xlu0 %82
    %84 = vrot.lane.b32.xlu0 %v69, 126
    %v85 = vpop.permute.xlu0 %84
    %86 = vrot.lane.b32.xlu0 %v66, 118
    %v87 = vpop.permute.xlu0 %86
    %88 = vrot.lane.b32.xlu0 %v67, 118
    %v89 = vpop.permute.xlu0 %88
    %90 = vrot.lane.b32.xlu0 %v68, 118
    %v91 = vpop.permute.xlu0 %90
    %92 = vrot.lane.b32.xlu0 %v69, 118
    %v93 = vpop.permute.xlu0 %92
    %94 = vrot.lane.b32.xlu0 %v66, 117
    %v95 = vpop.permute.xlu0 %94
    %96 = vrot.lane.b32.xlu0 %v67, 117
    %v97 = vpop.permute.xlu0 %96
    %98 = vrot.lane.b32.xlu0 %v68, 117
    %v99 = vpop.permute.xlu0 %98
    %100 = vrot.lane.b32.xlu0 %v69, 117
    %v101 = vpop.permute.xlu0 %100
    %102 = vrot.lane.b32.xlu0 %v66, 116
    %v103 = vpop.permute.xlu0 %102
    %104 = vrot.lane.b32.xlu0 %v67, 116
    %v105 = vpop.permute.xlu0 %104
    %106 = vrot.lane.b32.xlu0 %v68, 116
    %v107 = vpop.permute.xlu0 %106
    %108 = vrot.lane.b32.xlu0 %v69, 116
    %v109 = vpop.permute.xlu0 %108
    %110 = vrot.lane.b32.xlu0 %v66, 108
    %v111 = vpop.permute.xlu0 %110
    %112 = vrot.lane.b32.xlu0 %v67, 108
    %v113 = vpop.permute.xlu0 %112
    %114 = vrot.lane.b32.xlu0 %v68, 108
    %v115 = vpop.permute.xlu0 %114
    %116 = vrot.lane.b32.xlu0 %v69, 108
    %v117 = vpop.permute.xlu0 %116
    %118 = vrot.lane.b32.xlu0 %v66, 107
    %v119 = vpop.permute.xlu0 %118
    %120 = vrot.lane.b32.xlu0 %v67, 107
    %v121 = vpop.permute.xlu0 %120
    %122 = vrot.lane.b32.xlu0 %v68, 107
    %v123 = vpop.permute.xlu0 %122
    %124 = vrot.lane.b32.xlu0 %v69, 107
    %v125 = vpop.permute.xlu0 %124
    %126 = vrot.lane.b32.xlu0 %v66, 106
    %v127 = vpop.permute.xlu0 %126
    %128 = vrot.lane.b32.xlu0 %v67, 106
    %v129 = vpop.permute.xlu0 %128
    %130 = vrot.lane.b32.xlu0 %v68, 106
    %v131 = vpop.permute.xlu0 %130
    %132 = vrot.lane.b32.xlu0 %v69, 106
    %v133 = vpop.permute.xlu0 %132
    %s134 = scalar_lea.vmem %s0, 32
    %v135 = vld [vmem:[%s134] sm:$0xf]
    %v136 = vld [vmem:[%s134 + $0x4] sm:$0xf]
    %v137 = vld [vmem:[%s134 + $0x8] sm:$0xf]
    %v138 = vld [vmem:[%s134 + $0xc] sm:$0xf]
    %v139 = vld [vmem:[%s134 + $0x10] sm:$0xf]
    %v140 = vld [vmem:[%s134 + $0x14] sm:$0xf]
    %v141 = vld [vmem:[%s134 + $0x18] sm:$0xf]
    %v142 = vld [vmem:[%s134 + $0x1c] sm:$0xf]
    %v151 = vunpack.c.l.b16 %v135
    %v152 = vunpack.c.l.b16 %v136
    %v153 = vunpack.c.l.b16 %v137
    %v154 = vunpack.c.l.b16 %v138
    %v155 = vunpack.c.l.b16 %v139
    %v156 = vunpack.c.l.b16 %v140
    %v157 = vunpack.c.l.b16 %v141
    %v158 = vunpack.c.l.b16 %v142
    %v159 = vpack.c.b16 %v152, %v151
    %v160 = vpack.c.b16 %v154, %v153
    %v161 = vpack.c.b16 %v156, %v155
    %v162 = vpack.c.b16 %v158, %v157
    %163 = vrot.lane.b32.xlu0 %v159, 127
    %v164 = vpop.permute.xlu0 %163
    %165 = vrot.lane.b32.xlu0 %v160, 127
    %v166 = vpop.permute.xlu0 %165
    %167 = vrot.lane.b32.xlu0 %v161, 127
    %v168 = vpop.permute.xlu0 %167
    %169 = vrot.lane.b32.xlu0 %v162, 127
    %v170 = vpop.permute.xlu0 %169
    %171 = vrot.lane.b32.xlu0 %v159, 126
    %v172 = vpop.permute.xlu0 %171
    %173 = vrot.lane.b32.xlu0 %v160, 126
    %v174 = vpop.permute.xlu0 %173
    %175 = vrot.lane.b32.xlu0 %v161, 126
    %v176 = vpop.permute.xlu0 %175
    %177 = vrot.lane.b32.xlu0 %v162, 126
    %v178 = vpop.permute.xlu0 %177
    %179 = vrot.lane.b32.xlu0 %v159, 118
    %v180 = vpop.permute.xlu0 %179
    %181 = vrot.lane.b32.xlu0 %v160, 118
    %v182 = vpop.permute.xlu0 %181
    %183 = vrot.lane.b32.xlu0 %v161, 118
    %v184 = vpop.permute.xlu0 %183
    %185 = vrot.lane.b32.xlu0 %v162, 118
    %v186 = vpop.permute.xlu0 %185
    %187 = vrot.lane.b32.xlu0 %v159, 117
    %v188 = vpop.permute.xlu0 %187
    %189 = vrot.lane.b32.xlu0 %v160, 117
    %v190 = vpop.permute.xlu0 %189
    %191 = vrot.lane.b32.xlu0 %v161, 117
    %v192 = vpop.permute.xlu0 %191
    %193 = vrot.lane.b32.xlu0 %v162, 117
    %v194 = vpop.permute.xlu0 %193
    %195 = vrot.lane.b32.xlu0 %v159, 116
    %v196 = vpop.permute.xlu0 %195
    %197 = vrot.lane.b32.xlu0 %v160, 116
    %v198 = vpop.permute.xlu0 %197
    %199 = vrot.lane.b32.xlu0 %v161, 116
    %v200 = vpop.permute.xlu0 %199
    %201 = vrot.lane.b32.xlu0 %v162, 116
    %v202 = vpop.permute.xlu0 %201
    %203 = vrot.lane.b32.xlu0 %v159, 108
    %v204 = vpop.permute.xlu0 %203
    %205 = vrot.lane.b32.xlu0 %v160, 108
    %v206 = vpop.permute.xlu0 %205
    %207 = vrot.lane.b32.xlu0 %v161, 108
    %v208 = vpop.permute.xlu0 %207
    %209 = vrot.lane.b32.xlu0 %v162, 108
    %v210 = vpop.permute.xlu0 %209
    %211 = vrot.lane.b32.xlu0 %v159, 107
    %v212 = vpop.permute.xlu0 %211
    %213 = vrot.lane.b32.xlu0 %v160, 107
    %v214 = vpop.permute.xlu0 %213
    %215 = vrot.lane.b32.xlu0 %v161, 107
    %v216 = vpop.permute.xlu0 %215
    %217 = vrot.lane.b32.xlu0 %v162, 107
    %v218 = vpop.permute.xlu0 %217
    %219 = vrot.lane.b32.xlu0 %v159, 106
    %v220 = vpop.permute.xlu0 %219
    %221 = vrot.lane.b32.xlu0 %v160, 106
    %v222 = vpop.permute.xlu0 %221
    %223 = vrot.lane.b32.xlu0 %v161, 106
    %v224 = vpop.permute.xlu0 %223
    %225 = vrot.lane.b32.xlu0 %v162, 106
    %v226 = vpop.permute.xlu0 %225
    %227 = vrot.lane.b32.xlu0 %v159, 78
    %v228 = vpop.permute.xlu0 %227
    %229 = vrot.lane.b32.xlu0 %v160, 78
    %v230 = vpop.permute.xlu0 %229
    %231 = vrot.lane.b32.xlu0 %v161, 78
    %v232 = vpop.permute.xlu0 %231
    %233 = vrot.lane.b32.xlu0 %v162, 78
    %v234 = vpop.permute.xlu0 %233
    %235 = vrot.lane.b32.xlu0 %v164, 78
    %v236 = vpop.permute.xlu0 %235
    %237 = vrot.lane.b32.xlu0 %v166, 78
    %v238 = vpop.permute.xlu0 %237
    %239 = vrot.lane.b32.xlu0 %v168, 78
    %v240 = vpop.permute.xlu0 %239
    %241 = vrot.lane.b32.xlu0 %v170, 78
    %v242 = vpop.permute.xlu0 %241
    %243 = vrot.lane.b32.xlu0 %v172, 78
    %v244 = vpop.permute.xlu0 %243
    %245 = vrot.lane.b32.xlu0 %v174, 78
    %v246 = vpop.permute.xlu0 %245
    %247 = vrot.lane.b32.xlu0 %v176, 78
    %v248 = vpop.permute.xlu0 %247
    %249 = vrot.lane.b32.xlu0 %v178, 78
    %v250 = vpop.permute.xlu0 %249
    %251 = vrot.lane.b32.xlu0 %v180, 78
    %v252 = vpop.permute.xlu0 %251
    %253 = vrot.lane.b32.xlu0 %v182, 78
    %v254 = vpop.permute.xlu0 %253
    %255 = vrot.lane.b32.xlu0 %v184, 78
    %v256 = vpop.permute.xlu0 %255
    %257 = vrot.lane.b32.xlu0 %v186, 78
    %v258 = vpop.permute.xlu0 %257
    %259 = vrot.lane.b32.xlu0 %v188, 78
    %v260 = vpop.permute.xlu0 %259
    %261 = vrot.lane.b32.xlu0 %v190, 78
    %v262 = vpop.permute.xlu0 %261
    %263 = vrot.lane.b32.xlu0 %v192, 78
    %v264 = vpop.permute.xlu0 %263
    %265 = vrot.lane.b32.xlu0 %v194, 78
    %v266 = vpop.permute.xlu0 %265
    %267 = vrot.lane.b32.xlu0 %v196, 78
    %v268 = vpop.permute.xlu0 %267
    %269 = vrot.lane.b32.xlu0 %v198, 78
    %v270 = vpop.permute.xlu0 %269
    %271 = vrot.lane.b32.xlu0 %v200, 78
    %v272 = vpop.permute.xlu0 %271
    %273 = vrot.lane.b32.xlu0 %v202, 78
    %v274 = vpop.permute.xlu0 %273
    %275 = vrot.lane.b32.xlu0 %v204, 78
    %v276 = vpop.permute.xlu0 %275
    %277 = vrot.lane.b32.xlu0 %v206, 78
    %v278 = vpop.permute.xlu0 %277
    %279 = vrot.lane.b32.xlu0 %v208, 78
    %v280 = vpop.permute.xlu0 %279
    %281 = vrot.lane.b32.xlu0 %v210, 78
    %v282 = vpop.permute.xlu0 %281
    %283 = vrot.lane.b32.xlu0 %v212, 78
    %v284 = vpop.permute.xlu0 %283
    %285 = vrot.lane.b32.xlu0 %v214, 78
    %v286 = vpop.permute.xlu0 %285
    %287 = vrot.lane.b32.xlu0 %v216, 78
    %v288 = vpop.permute.xlu0 %287
    %289 = vrot.lane.b32.xlu0 %v218, 78
    %v290 = vpop.permute.xlu0 %289
    %291 = vrot.lane.b32.xlu0 %v220, 78
    %v292 = vpop.permute.xlu0 %291
    %293 = vrot.lane.b32.xlu0 %v222, 78
    %v294 = vpop.permute.xlu0 %293
    %295 = vrot.lane.b32.xlu0 %v224, 78
    %v296 = vpop.permute.xlu0 %295
    %297 = vrot.lane.b32.xlu0 %v226, 78
    %v298 = vpop.permute.xlu0 %297
    %vm335 = vcmask 637952
    %v338 = vsel %vm335, %v66, %v228
    %v342 = vsel %vm335, %v67, %v230
    %v346 = vsel %vm335, %v68, %v232
    %v350 = vsel %vm335, %v69, %v234
    %v354 = vsel %vm335, %v71, %v236
    %v358 = vsel %vm335, %v73, %v238
    %v362 = vsel %vm335, %v75, %v240
    %v366 = vsel %vm335, %v77, %v242
    %v370 = vsel %vm335, %v79, %v244
    %v374 = vsel %vm335, %v81, %v246
    %v378 = vsel %vm335, %v83, %v248
    %v382 = vsel %vm335, %v85, %v250
    %v386 = vsel %vm335, %v87, %v252
    %v390 = vsel %vm335, %v89, %v254
    %v394 = vsel %vm335, %v91, %v256
    %v398 = vsel %vm335, %v93, %v258
    %v402 = vsel %vm335, %v95, %v260
    %v406 = vsel %vm335, %v97, %v262
    %v410 = vsel %vm335, %v99, %v264
    %v414 = vsel %vm335, %v101, %v266
    %v418 = vsel %vm335, %v103, %v268
    %v422 = vsel %vm335, %v105, %v270
    %v426 = vsel %vm335, %v107, %v272
    %v430 = vsel %vm335, %v109, %v274
    %v434 = vsel %vm335, %v111, %v276
    %v438 = vsel %vm335, %v113, %v278
    %v442 = vsel %vm335, %v115, %v280
    %v446 = vsel %vm335, %v117, %v282
    %v450 = vsel %vm335, %v119, %v284
    %v454 = vsel %vm335, %v121, %v286
    %v458 = vsel %vm335, %v123, %v288
    %v462 = vsel %vm335, %v125, %v290
    %v466 = vsel %vm335, %v127, %v292
    %v470 = vsel %vm335, %v129, %v294
    %v474 = vsel %vm335, %v131, %v296
    %v478 = vsel %vm335, %v133, %v298
    %v480 = vld [vmem:[%s1] sm:$0xff]
    %v481 = vld [vmem:[%s1 + $0x8] sm:$0xff]
    %v482 = vld [vmem:[%s1 + $0x10] sm:$0xf]
    %v483 = vld [vmem:[%s1 + $0x14] sm:$0xff]
    %v484 = vld [vmem:[%s1 + $0x1c] sm:$0xff]
    %v485 = vld [vmem:[%s1 + $0x24] sm:$0xf]
    %v486 = vld [vmem:[%s1 + $0x28] sm:$0xff]
    %v487 = vld [vmem:[%s1 + $0x30] sm:$0xff]
    %v488 = vld [vmem:[%s1 + $0x38] sm:$0xf]
    %v489 = vld [vmem:[%s1 + $0x3c] sm:$0xff]
    %v490 = vld [vmem:[%s1 + $0x44] sm:$0xff]
    %v491 = vld [vmem:[%s1 + $0x4c] sm:$0xf]
    %v492 = vld [vmem:[%s1 + $0x50] sm:$0xff]
    %v493 = vld [vmem:[%s1 + $0x58] sm:$0xff]
    %v494 = vld [vmem:[%s1 + $0x60] sm:$0xf]
    %v495 = vld [vmem:[%s1 + $0x64] sm:$0xff]
    %v496 = vld [vmem:[%s1 + $0x6c] sm:$0xff]
    %v497 = vld [vmem:[%s1 + $0x74] sm:$0xf]
    %v498 = vld [vmem:[%s1 + $0x78] sm:$0xff]
    %v499 = vld [vmem:[%s1 + $0x80] sm:$0xff]
    %v500 = vld [vmem:[%s1 + $0x88] sm:$0xf]
    %v501 = vld [vmem:[%s1 + $0x8c] sm:$0xff]
    %v502 = vld [vmem:[%s1 + $0x94] sm:$0xff]
    %v503 = vld [vmem:[%s1 + $0x9c] sm:$0xf]
    %v528 = vunpack.c.l.b16 %v480
    %v529 = vunpack.c.h.b16 %v480
    %v530 = vunpack.c.l.b16 %v481
    %v531 = vunpack.c.h.b16 %v481
    %v532 = vunpack.c.l.b16 %v482
    %v533 = vunpack.c.l.b16 %v483
    %v534 = vunpack.c.h.b16 %v483
    %v535 = vunpack.c.l.b16 %v484
    %v536 = vunpack.c.h.b16 %v484
    %v537 = vunpack.c.l.b16 %v485
    %v538 = vunpack.c.l.b16 %v486
    %v539 = vunpack.c.h.b16 %v486
    %v540 = vunpack.c.l.b16 %v487
    %v541 = vunpack.c.h.b16 %v487
    %v542 = vunpack.c.l.b16 %v488
    %v543 = vunpack.c.l.b16 %v489
    %v544 = vunpack.c.h.b16 %v489
    %v545 = vunpack.c.l.b16 %v490
    %v546 = vunpack.c.h.b16 %v490
    %v547 = vunpack.c.l.b16 %v491
    %v548 = vunpack.c.l.b16 %v492
    %v549 = vunpack.c.h.b16 %v492
    %v550 = vunpack.c.l.b16 %v493
    %v551 = vunpack.c.h.b16 %v493
    %v552 = vunpack.c.l.b16 %v494
    %v553 = vunpack.c.l.b16 %v495
    %v554 = vunpack.c.h.b16 %v495
    %v555 = vunpack.c.l.b16 %v496
    %v556 = vunpack.c.h.b16 %v496
    %v557 = vunpack.c.l.b16 %v497
    %v558 = vunpack.c.l.b16 %v498
    %v559 = vunpack.c.h.b16 %v498
    %v560 = vunpack.c.l.b16 %v499
    %v561 = vunpack.c.h.b16 %v499
    %v562 = vunpack.c.l.b16 %v500
    %v563 = vunpack.c.l.b16 %v501
    %v564 = vunpack.c.h.b16 %v501
    %v565 = vunpack.c.l.b16 %v502
    %v566 = vunpack.c.h.b16 %v502
    %v567 = vunpack.c.l.b16 %v503
    %v568 = vpack.c.b16 %v533, %v528
    %v569 = vpack.c.b16 %v534, %v529
    %v570 = vpack.c.b16 %v535, %v530
    %v571 = vpack.c.b16 %v536, %v531
    %v572 = vpack.c.b16 %v537, %v532
    %v573 = vpack.c.b16 %v543, %v538
    %v574 = vpack.c.b16 %v544, %v539
    %v575 = vpack.c.b16 %v545, %v540
    %v576 = vpack.c.b16 %v546, %v541
    %v577 = vpack.c.b16 %v547, %v542
    %v578 = vpack.c.b16 %v553, %v548
    %v579 = vpack.c.b16 %v554, %v549
    %v580 = vpack.c.b16 %v555, %v550
    %v581 = vpack.c.b16 %v556, %v551
    %v582 = vpack.c.b16 %v557, %v552
    %v583 = vpack.c.b16 %v563, %v558
    %v584 = vpack.c.b16 %v564, %v559
    %v585 = vpack.c.b16 %v565, %v560
    %v586 = vpack.c.b16 %v566, %v561
    %v587 = vpack.c.b16 %v567, %v562
    %vm604 = vcmask 523264
    %v606 = vsel %vm604, %v572, 0
    %v609 = vsel %vm604, %v577, 0
    %v612 = vsel %vm604, %v582, 0
    %v615 = vsel %vm604, %v587, 0
    %617 = vmatpush.bf16.msra.mxu0 %v366
    %618 = vmatpush.bf16.msra.mxu0 %v362
    %619 = vmatpush.bf16.msra.mxu0 %v358
    %620 = vmatpush.bf16.msra.mxu0 %v354
    %621 = vmatpush.bf16.msra.mxu0 %v350
    %622 = vmatpush.bf16.msra.mxu0 %v346
    %623 = vmatpush.bf16.msra.mxu0 %v342
    %624 = vmatpush.bf16.msra.mxu0 %v338
    %625 = vmatmul.bf16.gmra.mxu0 %v568
    %v626 = vpop.f32.mrf.mxu0
    %v627 = vadd.f32 0.0, %v626
    %v628 = vpop.f32.mrf.mxu0
    %v629 = vadd.f32 0.0, %v628
    %630 = vmatmul.bf16.gmra.mxu0 %v573
    %v631 = vpop.f32.mrf.mxu0
    %v632 = vadd.f32 0.0, %v631
    %v633 = vpop.f32.mrf.mxu0
    %v634 = vadd.f32 0.0, %v633
    %635 = vmatmul.bf16.gmra.mxu0 %v578
    %v636 = vpop.f32.mrf.mxu0
    %v637 = vadd.f32 0.0, %v636
    %v638 = vpop.f32.mrf.mxu0
    %v639 = vadd.f32 0.0, %v638
    %640 = vmatmul.bf16.gmra.mxu0 %v583
    %v641 = vpop.f32.mrf.mxu0
    %v642 = vadd.f32 0.0, %v641
    %v643 = vpop.f32.mrf.mxu0
    %v644 = vadd.f32 0.0, %v643
    %645 = vdwg.mxu0
    %646 = vmatpush.bf16.msra.mxu0 %v398
    %647 = vmatpush.bf16.msra.mxu0 %v394
    %648 = vmatpush.bf16.msra.mxu0 %v390
    %649 = vmatpush.bf16.msra.mxu0 %v386
    %650 = vmatpush.bf16.msra.mxu0 %v382
    %651 = vmatpush.bf16.msra.mxu0 %v378
    %652 = vmatpush.bf16.msra.mxu0 %v374
    %653 = vmatpush.bf16.msra.mxu0 %v370
    %654 = vmatmul.bf16.gmra.mxu0 %v569
    %v655 = vpop.f32.mrf.mxu0
    %v656 = vadd.f32 %v627, %v655
    %v657 = vpop.f32.mrf.mxu0
    %v658 = vadd.f32 %v629, %v657
    %659 = vmatmul.bf16.gmra.mxu0 %v574
    %v660 = vpop.f32.mrf.mxu0
    %v661 = vadd.f32 %v632, %v660
    %v662 = vpop.f32.mrf.mxu0
    %v663 = vadd.f32 %v634, %v662
    %664 = vmatmul.bf16.gmra.mxu0 %v579
    %v665 = vpop.f32.mrf.mxu0
    %v666 = vadd.f32 %v637, %v665
    %v667 = vpop.f32.mrf.mxu0
    %v668 = vadd.f32 %v639, %v667
    %669 = vmatmul.bf16.gmra.mxu0 %v584
    %v670 = vpop.f32.mrf.mxu0
    %v671 = vadd.f32 %v642, %v670
    %v672 = vpop.f32.mrf.mxu0
    %v673 = vadd.f32 %v644, %v672
    %674 = vdwg.mxu0
    %675 = vmatpush.bf16.msra.mxu0 %v430
    %676 = vmatpush.bf16.msra.mxu0 %v426
    %677 = vmatpush.bf16.msra.mxu0 %v422
    %678 = vmatpush.bf16.msra.mxu0 %v418
    %679 = vmatpush.bf16.msra.mxu0 %v414
    %680 = vmatpush.bf16.msra.mxu0 %v410
    %681 = vmatpush.bf16.msra.mxu0 %v406
    %682 = vmatpush.bf16.msra.mxu0 %v402
    %683 = vmatmul.bf16.gmra.mxu0 %v570
    %v684 = vpop.f32.mrf.mxu0
    %v685 = vadd.f32 %v656, %v684
    %v686 = vpop.f32.mrf.mxu0
    %v687 = vadd.f32 %v658, %v686
    %688 = vmatmul.bf16.gmra.mxu0 %v575
    %v689 = vpop.f32.mrf.mxu0
    %v690 = vadd.f32 %v661, %v689
    %v691 = vpop.f32.mrf.mxu0
    %v692 = vadd.f32 %v663, %v691
    %693 = vmatmul.bf16.gmra.mxu0 %v580
    %v694 = vpop.f32.mrf.mxu0
    %v695 = vadd.f32 %v666, %v694
    %v696 = vpop.f32.mrf.mxu0
    %v697 = vadd.f32 %v668, %v696
    %698 = vmatmul.bf16.gmra.mxu0 %v585
    %v699 = vpop.f32.mrf.mxu0
    %v700 = vadd.f32 %v671, %v699
    %v701 = vpop.f32.mrf.mxu0
    %v702 = vadd.f32 %v673, %v701
    %703 = vdwg.mxu0
    %704 = vmatpush.bf16.msra.mxu0 %v462
    %705 = vmatpush.bf16.msra.mxu0 %v458
    %706 = vmatpush.bf16.msra.mxu0 %v454
    %707 = vmatpush.bf16.msra.mxu0 %v450
    %708 = vmatpush.bf16.msra.mxu0 %v446
    %709 = vmatpush.bf16.msra.mxu0 %v442
    %710 = vmatpush.bf16.msra.mxu0 %v438
    %711 = vmatpush.bf16.msra.mxu0 %v434
    %712 = vmatmul.bf16.gmra.mxu0 %v571
    %v713 = vpop.f32.mrf.mxu0
    %v714 = vadd.f32 %v685, %v713
    %v715 = vpop.f32.mrf.mxu0
    %v716 = vadd.f32 %v687, %v715
    %717 = vmatmul.bf16.gmra.mxu0 %v576
    %v718 = vpop.f32.mrf.mxu0
    %v719 = vadd.f32 %v690, %v718
    %v720 = vpop.f32.mrf.mxu0
    %v721 = vadd.f32 %v692, %v720
    %722 = vmatmul.bf16.gmra.mxu0 %v581
    %v723 = vpop.f32.mrf.mxu0
    %v724 = vadd.f32 %v695, %v723
    %v725 = vpop.f32.mrf.mxu0
    %v726 = vadd.f32 %v697, %v725
    %727 = vmatmul.bf16.gmra.mxu0 %v586
    %v728 = vpop.f32.mrf.mxu0
    %v729 = vadd.f32 %v700, %v728
    %v730 = vpop.f32.mrf.mxu0
    %v731 = vadd.f32 %v702, %v730
    %732 = vdwg.mxu0
    %733 = vmatpush.bf16.msra.mxu0 0
    %734 = vmatpush.bf16.msra.mxu0 0
    %735 = vmatpush.bf16.msra.mxu0 0
    %736 = vmatpush.bf16.msra.mxu0 0
    %737 = vmatpush.bf16.msra.mxu0 %v478
    %738 = vmatpush.bf16.msra.mxu0 %v474
    %739 = vmatpush.bf16.msra.mxu0 %v470
    %740 = vmatpush.bf16.msra.mxu0 %v466
    %741 = vmatmul.bf16.gmra.mxu0 %v606
    %v742 = vpop.f32.mrf.mxu0
    %v743 = vadd.f32 %v714, %v742
    %v744 = vpop.f32.mrf.mxu0
    %v745 = vadd.f32 %v716, %v744
    %746 = vmatmul.bf16.gmra.mxu0 %v609
    %v747 = vpop.f32.mrf.mxu0
    %v748 = vadd.f32 %v719, %v747
    %v749 = vpop.f32.mrf.mxu0
    %v750 = vadd.f32 %v721, %v749
    %751 = vmatmul.bf16.gmra.mxu0 %v612
    %v752 = vpop.f32.mrf.mxu0
    %v753 = vadd.f32 %v724, %v752
    %v754 = vpop.f32.mrf.mxu0
    %v755 = vadd.f32 %v726, %v754
    %756 = vmatmul.bf16.gmra.mxu0 %v615
    %v757 = vpop.f32.mrf.mxu0
    %v758 = vadd.f32 %v729, %v757
    %v759 = vpop.f32.mrf.mxu0
    %v760 = vadd.f32 %v731, %v759
    %761 = vdwg.mxu0
    %762 = vmatpush.bf16.msra.mxu0 %v242
    %763 = vmatpush.bf16.msra.mxu0 %v240
    %764 = vmatpush.bf16.msra.mxu0 %v238
    %765 = vmatpush.bf16.msra.mxu0 %v236
    %766 = vmatpush.bf16.msra.mxu0 %v234
    %767 = vmatpush.bf16.msra.mxu0 %v232
    %768 = vmatpush.bf16.msra.mxu0 %v230
    %769 = vmatpush.bf16.msra.mxu0 %v228
    %770 = vmatmul.bf16.gmra.mxu0 %v568
    %v771 = vpop.f32.mrf.mxu0
    %v772 = vadd.f32 0.0, %v771
    %v773 = vpop.f32.mrf.mxu0
    %v774 = vadd.f32 0.0, %v773
    %775 = vmatmul.bf16.gmra.mxu0 %v573
    %v776 = vpop.f32.mrf.mxu0
    %v777 = vadd.f32 0.0, %v776
    %v778 = vpop.f32.mrf.mxu0
    %v779 = vadd.f32 0.0, %v778
    %780 = vmatmul.bf16.gmra.mxu0 %v578
    %v781 = vpop.f32.mrf.mxu0
    %v782 = vadd.f32 0.0, %v781
    %v783 = vpop.f32.mrf.mxu0
    %v784 = vadd.f32 0.0, %v783
    %785 = vmatmul.bf16.gmra.mxu0 %v583
    %v786 = vpop.f32.mrf.mxu0
    %v787 = vadd.f32 0.0, %v786
    %v788 = vpop.f32.mrf.mxu0
    %v789 = vadd.f32 0.0, %v788
    %790 = vdwg.mxu0
    %791 = vmatpush.bf16.msra.mxu0 %v258
    %792 = vmatpush.bf16.msra.mxu0 %v256
    %793 = vmatpush.bf16.msra.mxu0 %v254
    %794 = vmatpush.bf16.msra.mxu0 %v252
    %795 = vmatpush.bf16.msra.mxu0 %v250
    %796 = vmatpush.bf16.msra.mxu0 %v248
    %797 = vmatpush.bf16.msra.mxu0 %v246
    %798 = vmatpush.bf16.msra.mxu0 %v244
    %799 = vmatmul.bf16.gmra.mxu0 %v569
    %v800 = vpop.f32.mrf.mxu0
    %v801 = vadd.f32 %v772, %v800
    %v802 = vpop.f32.mrf.mxu0
    %v803 = vadd.f32 %v774, %v802
    %804 = vmatmul.bf16.gmra.mxu0 %v574
    %v805 = vpop.f32.mrf.mxu0
    %v806 = vadd.f32 %v777, %v805
    %v807 = vpop.f32.mrf.mxu0
    %v808 = vadd.f32 %v779, %v807
    %809 = vmatmul.bf16.gmra.mxu0 %v579
    %v810 = vpop.f32.mrf.mxu0
    %v811 = vadd.f32 %v782, %v810
    %v812 = vpop.f32.mrf.mxu0
    %v813 = vadd.f32 %v784, %v812
    %814 = vmatmul.bf16.gmra.mxu0 %v584
    %v815 = vpop.f32.mrf.mxu0
    %v816 = vadd.f32 %v787, %v815
    %v817 = vpop.f32.mrf.mxu0
    %v818 = vadd.f32 %v789, %v817
    %819 = vdwg.mxu0
    %820 = vmatpush.bf16.msra.mxu0 %v274
    %821 = vmatpush.bf16.msra.mxu0 %v272
    %822 = vmatpush.bf16.msra.mxu0 %v270
    %823 = vmatpush.bf16.msra.mxu0 %v268
    %824 = vmatpush.bf16.msra.mxu0 %v266
    %825 = vmatpush.bf16.msra.mxu0 %v264
    %826 = vmatpush.bf16.msra.mxu0 %v262
    %827 = vmatpush.bf16.msra.mxu0 %v260
    %828 = vmatmul.bf16.gmra.mxu0 %v570
    %v829 = vpop.f32.mrf.mxu0
    %v830 = vadd.f32 %v801, %v829
    %v831 = vpop.f32.mrf.mxu0
    %v832 = vadd.f32 %v803, %v831
    %833 = vmatmul.bf16.gmra.mxu0 %v575
    %v834 = vpop.f32.mrf.mxu0
    %v835 = vadd.f32 %v806, %v834
    %v836 = vpop.f32.mrf.mxu0
    %v837 = vadd.f32 %v808, %v836
    %838 = vmatmul.bf16.gmra.mxu0 %v580
    %v839 = vpop.f32.mrf.mxu0
    %v840 = vadd.f32 %v811, %v839
    %v841 = vpop.f32.mrf.mxu0
    %v842 = vadd.f32 %v813, %v841
    %843 = vmatmul.bf16.gmra.mxu0 %v585
    %v844 = vpop.f32.mrf.mxu0
    %v845 = vadd.f32 %v816, %v844
    %v846 = vpop.f32.mrf.mxu0
    %v847 = vadd.f32 %v818, %v846
    %848 = vdwg.mxu0
    %849 = vmatpush.bf16.msra.mxu0 %v290
    %850 = vmatpush.bf16.msra.mxu0 %v288
    %851 = vmatpush.bf16.msra.mxu0 %v286
    %852 = vmatpush.bf16.msra.mxu0 %v284
    %853 = vmatpush.bf16.msra.mxu0 %v282
    %854 = vmatpush.bf16.msra.mxu0 %v280
    %855 = vmatpush.bf16.msra.mxu0 %v278
    %856 = vmatpush.bf16.msra.mxu0 %v276
    %857 = vmatmul.bf16.gmra.mxu0 %v571
    %v858 = vpop.f32.mrf.mxu0
    %v859 = vadd.f32 %v830, %v858
    %v860 = vpop.f32.mrf.mxu0
    %v861 = vadd.f32 %v832, %v860
    %862 = vmatmul.bf16.gmra.mxu0 %v576
    %v863 = vpop.f32.mrf.mxu0
    %v864 = vadd.f32 %v835, %v863
    %v865 = vpop.f32.mrf.mxu0
    %v866 = vadd.f32 %v837, %v865
    %867 = vmatmul.bf16.gmra.mxu0 %v581
    %v868 = vpop.f32.mrf.mxu0
    %v869 = vadd.f32 %v840, %v868
    %v870 = vpop.f32.mrf.mxu0
    %v871 = vadd.f32 %v842, %v870
    %872 = vmatmul.bf16.gmra.mxu0 %v586
    %v873 = vpop.f32.mrf.mxu0
    %v874 = vadd.f32 %v845, %v873
    %v875 = vpop.f32.mrf.mxu0
    %v876 = vadd.f32 %v847, %v875
    %877 = vdwg.mxu0
    %878 = vmatpush.bf16.msra.mxu0 0
    %879 = vmatpush.bf16.msra.mxu0 0
    %880 = vmatpush.bf16.msra.mxu0 0
    %881 = vmatpush.bf16.msra.mxu0 0
    %882 = vmatpush.bf16.msra.mxu0 %v298
    %883 = vmatpush.bf16.msra.mxu0 %v296
    %884 = vmatpush.bf16.msra.mxu0 %v294
    %885 = vmatpush.bf16.msra.mxu0 %v292
    %886 = vmatmul.bf16.gmra.mxu0 %v606
    %v887 = vpop.f32.mrf.mxu0
    %v888 = vadd.f32 %v859, %v887
    %v889 = vpop.f32.mrf.mxu0
    %v890 = vadd.f32 %v861, %v889
    %891 = vmatmul.bf16.gmra.mxu0 %v609
    %v892 = vpop.f32.mrf.mxu0
    %v893 = vadd.f32 %v864, %v892
    %v894 = vpop.f32.mrf.mxu0
    %v895 = vadd.f32 %v866, %v894
    %896 = vmatmul.bf16.gmra.mxu0 %v612
    %v897 = vpop.f32.mrf.mxu0
    %v898 = vadd.f32 %v869, %v897
    %v899 = vpop.f32.mrf.mxu0
    %v900 = vadd.f32 %v871, %v899
    %901 = vmatmul.bf16.gmra.mxu0 %v615
    %v902 = vpop.f32.mrf.mxu0
    %v903 = vadd.f32 %v874, %v902
    %v904 = vpop.f32.mrf.mxu0
    %v905 = vadd.f32 %v876, %v904
    %906 = vdwg.mxu0
    %v907 = vld [vmem:[%s2] sm:$0xff]
    %v908 = vld [vmem:[%s2 + $0x8] sm:$0xff]
    %v909 = vld [vmem:[%s2 + $0x10] sm:$0xff]
    %v910 = vld [vmem:[%s2 + $0x18] sm:$0xff]
    %v911 = vld [vmem:[%s2 + $0x20] sm:$0xff]
    %v912 = vld [vmem:[%s2 + $0x28] sm:$0xff]
    %v913 = vld [vmem:[%s2 + $0x30] sm:$0xff]
    %v914 = vld [vmem:[%s2 + $0x38] sm:$0xff]
    %v915 = vld [vmem:[%s2 + $0x40] sm:$0xff]
    %v916 = vld [vmem:[%s2 + $0x48] sm:$0xff]
    %v917 = vld [vmem:[%s2 + $0x50] sm:$0xff]
    %v918 = vld [vmem:[%s2 + $0x58] sm:$0xff]
    %v919 = vld [vmem:[%s2 + $0x60] sm:$0xff]
    %v920 = vld [vmem:[%s2 + $0x68] sm:$0xff]
    %v921 = vld [vmem:[%s2 + $0x70] sm:$0xff]
    %v922 = vld [vmem:[%s2 + $0x78] sm:$0xff]
    %v923 = vld [vmem:[%s2 + $0x80] sm:$0xff]
    %v924 = vld [vmem:[%s2 + $0x88] sm:$0xff]
    %v925 = vld [vmem:[%s2 + $0x90] sm:$0xff]
    %v926 = vld [vmem:[%s2 + $0x98] sm:$0xf]
    %vm927 = vcmask 228352
    %v929 = vsel %vm927, %v888, 0
    %v932 = vsel %vm927, %v890, 0
    %v935 = vsel %vm927, %v893, 0
    %v938 = vsel %vm927, %v895, 0
    %v941 = vsel %vm927, %v898, 0
    %v944 = vsel %vm927, %v900, 0
    %v947 = vsel %vm927, %v903, 0
    %v950 = vsel %vm927, %v905, 0
    %vm952 = vcmask 1043456
    %v954 = vsel %vm952, %v926, 0
    %956 = vmatpush.msra.mxu0 %v922
    %957 = vmatpush.msra.mxu0 %v921
    %958 = vmatpush.msra.mxu0 %v920
    %959 = vmatpush.msra.mxu0 %v919
    %960 = vmatpush.msra.mxu0 %v918
    %961 = vmatpush.msra.mxu0 %v917
    %962 = vmatpush.msra.mxu0 %v916
    %963 = vmatpush.msra.mxu0 %v915
    %964 = vmatpush.msra.mxu0 %v914
    %965 = vmatpush.msra.mxu0 %v913
    %966 = vmatpush.msra.mxu0 %v912
    %967 = vmatpush.msra.mxu0 %v911
    %968 = vmatpush.msra.mxu0 %v910
    %969 = vmatpush.msra.mxu0 %v909
    %970 = vmatpush.msra.mxu0 %v908
    %971 = vmatpush.msra.mxu0 %v907
    %972 = vmatmul.f32.gmra.mxu0 %v743
    %v973 = vpop.f32.mrf.mxu0
    %v974 = vadd.f32 0.0, %v973
    %975 = vmatmul.f32.gmra.mxu0 %v745
    %v976 = vpop.f32.mrf.mxu0
    %v977 = vadd.f32 0.0, %v976
    %978 = vmatmul.f32.gmra.mxu0 %v748
    %v979 = vpop.f32.mrf.mxu0
    %v980 = vadd.f32 0.0, %v979
    %981 = vmatmul.f32.gmra.mxu0 %v750
    %v982 = vpop.f32.mrf.mxu0
    %v983 = vadd.f32 0.0, %v982
    %984 = vmatmul.f32.gmra.mxu0 %v753
    %v985 = vpop.f32.mrf.mxu0
    %v986 = vadd.f32 0.0, %v985
    %987 = vmatmul.f32.gmra.mxu0 %v755
    %v988 = vpop.f32.mrf.mxu0
    %v989 = vadd.f32 0.0, %v988
    %990 = vmatmul.f32.gmra.mxu0 %v758
    %v991 = vpop.f32.mrf.mxu0
    %v992 = vadd.f32 0.0, %v991
    %993 = vmatmul.f32.gmra.mxu0 %v760
    %v994 = vpop.f32.mrf.mxu0
    %v995 = vadd.f32 0.0, %v994
    %996 = vdwg.mxu0
    %997 = vmatpush.msra.mxu0 0.0
    %998 = vmatpush.msra.mxu0 0.0
    %999 = vmatpush.msra.mxu0 0.0
    %1000 = vmatpush.msra.mxu0 0.0
    %1001 = vmatpush.msra.mxu0 0.0
    %1002 = vmatpush.msra.mxu0 0.0
    %1003 = vmatpush.msra.mxu0 0.0
    %1004 = vmatpush.msra.mxu0 0.0
    %1005 = vmatpush.msra.mxu0 0.0
    %1006 = vmatpush.msra.mxu0 0.0
    %1007 = vmatpush.msra.mxu0 0.0
    %1008 = vmatpush.msra.mxu0 0.0
    %1009 = vmatpush.msra.mxu0 %v954
    %1010 = vmatpush.msra.mxu0 %v925
    %1011 = vmatpush.msra.mxu0 %v924
    %1012 = vmatpush.msra.mxu0 %v923
    %1013 = vmatmul.f32.gmra.mxu0 %v929
    %v1014 = vpop.f32.mrf.mxu0
    %v1015 = vadd.f32 %v974, %v1014
    %1016 = vmatmul.f32.gmra.mxu0 %v932
    %v1017 = vpop.f32.mrf.mxu0
    %v1018 = vadd.f32 %v977, %v1017
    %1019 = vmatmul.f32.gmra.mxu0 %v935
    %v1020 = vpop.f32.mrf.mxu0
    %v1021 = vadd.f32 %v980, %v1020
    %1022 = vmatmul.f32.gmra.mxu0 %v938
    %v1023 = vpop.f32.mrf.mxu0
    %v1024 = vadd.f32 %v983, %v1023
    %1025 = vmatmul.f32.gmra.mxu0 %v941
    %v1026 = vpop.f32.mrf.mxu0
    %v1027 = vadd.f32 %v986, %v1026
    %1028 = vmatmul.f32.gmra.mxu0 %v944
    %v1029 = vpop.f32.mrf.mxu0
    %v1030 = vadd.f32 %v989, %v1029
    %1031 = vmatmul.f32.gmra.mxu0 %v947
    %v1032 = vpop.f32.mrf.mxu0
    %v1033 = vadd.f32 %v992, %v1032
    %1034 = vmatmul.f32.gmra.mxu0 %v950
    %v1035 = vpop.f32.mrf.mxu0
    %v1036 = vadd.f32 %v995, %v1035
    %1037 = vdwg.mxu0
    %v1038 = vmul.f32 %v743, %v743
    %v1039 = vmul.f32 %v888, %v888
    %v1040 = vmul.f32 %v745, %v745
    %v1041 = vmul.f32 %v890, %v890
    %v1042 = vmul.f32 %v748, %v748
    %v1043 = vmul.f32 %v893, %v893
    %v1044 = vmul.f32 %v750, %v750
    %v1045 = vmul.f32 %v895, %v895
    %v1046 = vmul.f32 %v753, %v753
    %v1047 = vmul.f32 %v898, %v898
    %v1048 = vmul.f32 %v755, %v755
    %v1049 = vmul.f32 %v900, %v900
    %v1050 = vmul.f32 %v758, %v758
    %v1051 = vmul.f32 %v903, %v903
    %v1052 = vmul.f32 %v760, %v760
    %v1053 = vmul.f32 %v905, %v905
    %v1055 = vsel %vm927, %v1039, 0
    %v1058 = vsel %vm927, %v1041, 0
    %v1061 = vsel %vm927, %v1043, 0
    %v1064 = vsel %vm927, %v1045, 0
    %v1067 = vsel %vm927, %v1047, 0
    %v1070 = vsel %vm927, %v1049, 0
    %v1073 = vsel %vm927, %v1051, 0
    %v1076 = vsel %vm927, %v1053, 0
    %1078 = vmatpush.msra.mxu0 %v922
    %1079 = vmatpush.msra.mxu0 %v921
    %1080 = vmatpush.msra.mxu0 %v920
    %1081 = vmatpush.msra.mxu0 %v919
    %1082 = vmatpush.msra.mxu0 %v918
    %1083 = vmatpush.msra.mxu0 %v917
    %1084 = vmatpush.msra.mxu0 %v916
    %1085 = vmatpush.msra.mxu0 %v915
    %1086 = vmatpush.msra.mxu0 %v914
    %1087 = vmatpush.msra.mxu0 %v913
    %1088 = vmatpush.msra.mxu0 %v912
    %1089 = vmatpush.msra.mxu0 %v911
    %1090 = vmatpush.msra.mxu0 %v910
    %1091 = vmatpush.msra.mxu0 %v909
    %1092 = vmatpush.msra.mxu0 %v908
    %1093 = vmatpush.msra.mxu0 %v907
    %1094 = vmatmul.f32.gmra.mxu0 %v1038
    %v1095 = vpop.f32.mrf.mxu0
    %v1096 = vadd.f32 0.0, %v1095
    %1097 = vmatmul.f32.gmra.mxu0 %v1040
    %v1098 = vpop.f32.mrf.mxu0
    %v1099 = vadd.f32 0.0, %v1098
    %1100 = vmatmul.f32.gmra.mxu0 %v1042
    %v1101 = vpop.f32.mrf.mxu0
    %v1102 = vadd.f32 0.0, %v1101
    %1103 = vmatmul.f32.gmra.mxu0 %v1044
    %v1104 = vpop.f32.mrf.mxu0
    %v1105 = vadd.f32 0.0, %v1104
    %1106 = vmatmul.f32.gmra.mxu0 %v1046
    %v1107 = vpop.f32.mrf.mxu0
    %v1108 = vadd.f32 0.0, %v1107
    %1109 = vmatmul.f32.gmra.mxu0 %v1048
    %v1110 = vpop.f32.mrf.mxu0
    %v1111 = vadd.f32 0.0, %v1110
    %1112 = vmatmul.f32.gmra.mxu0 %v1050
    %v1113 = vpop.f32.mrf.mxu0
    %v1114 = vadd.f32 0.0, %v1113
    %1115 = vmatmul.f32.gmra.mxu0 %v1052
    %v1116 = vpop.f32.mrf.mxu0
    %v1117 = vadd.f32 0.0, %v1116
    %1118 = vdwg.mxu0
    %1119 = vmatpush.msra.mxu0 0.0
    %1120 = vmatpush.msra.mxu0 0.0
    %1121 = vmatpush.msra.mxu0 0.0
    %1122 = vmatpush.msra.mxu0 0.0
    %1123 = vmatpush.msra.mxu0 0.0
    %1124 = vmatpush.msra.mxu0 0.0
    %1125 = vmatpush.msra.mxu0 0.0
    %1126 = vmatpush.msra.mxu0 0.0
    %1127 = vmatpush.msra.mxu0 0.0
    %1128 = vmatpush.msra.mxu0 0.0
    %1129 = vmatpush.msra.mxu0 0.0
    %1130 = vmatpush.msra.mxu0 0.0
    %1131 = vmatpush.msra.mxu0 %v954
    %1132 = vmatpush.msra.mxu0 %v925
    %1133 = vmatpush.msra.mxu0 %v924
    %1134 = vmatpush.msra.mxu0 %v923
    %1135 = vmatmul.f32.gmra.mxu0 %v1055
    %v1136 = vpop.f32.mrf.mxu0
    %v1137 = vadd.f32 %v1096, %v1136
    %1138 = vmatmul.f32.gmra.mxu0 %v1058
    %v1139 = vpop.f32.mrf.mxu0
    %v1140 = vadd.f32 %v1099, %v1139
    %1141 = vmatmul.f32.gmra.mxu0 %v1061
    %v1142 = vpop.f32.mrf.mxu0
    %v1143 = vadd.f32 %v1102, %v1142
    %1144 = vmatmul.f32.gmra.mxu0 %v1064
    %v1145 = vpop.f32.mrf.mxu0
    %v1146 = vadd.f32 %v1105, %v1145
    %1147 = vmatmul.f32.gmra.mxu0 %v1067
    %v1148 = vpop.f32.mrf.mxu0
    %v1149 = vadd.f32 %v1108, %v1148
    %1150 = vmatmul.f32.gmra.mxu0 %v1070
    %v1151 = vpop.f32.mrf.mxu0
    %v1152 = vadd.f32 %v1111, %v1151
    %1153 = vmatmul.f32.gmra.mxu0 %v1073
    %v1154 = vpop.f32.mrf.mxu0
    %v1155 = vadd.f32 %v1114, %v1154
    %1156 = vmatmul.f32.gmra.mxu0 %v1076
    %v1157 = vpop.f32.mrf.mxu0
    %v1158 = vadd.f32 %v1117, %v1157
    %1159 = vdwg.mxu0
    %v1160 = vld [vmem:[%s4] sm:$0xff]
    %v1161 = vld [vmem:[%s4 + $0x8] sm:$0xff]
    %v1162 = vld [vmem:[%s4 + $0x10] sm:$0xff]
    %v1163 = vld [vmem:[%s4 + $0x18] sm:$0xff]
    %v1164 = vld [vmem:[%s4 + $0x20] sm:$0xff]
    %v1165 = vld [vmem:[%s4 + $0x28] sm:$0xff]
    %v1166 = vld [vmem:[%s4 + $0x30] sm:$0xff]
    %v1167 = vld [vmem:[%s4 + $0x38] sm:$0xff]
    %v1169 = vsel %vm604, %v1160, 0
    %v1172 = vsel %vm604, %v1161, 0
    %v1175 = vsel %vm604, %v1162, 0
    %v1178 = vsel %vm604, %v1163, 0
    %v1181 = vsel %vm604, %v1164, 0
    %v1184 = vsel %vm604, %v1165, 0
    %v1187 = vsel %vm604, %v1166, 0
    %v1190 = vsel %vm604, %v1167, 0
    %1192 = vmatpush.msra.mxu0 0.0
    %1193 = vmatpush.msra.mxu0 0.0
    %1194 = vmatpush.msra.mxu0 0.0
    %1195 = vmatpush.msra.mxu0 0.0
    %1196 = vmatpush.msra.mxu0 0.0
    %1197 = vmatpush.msra.mxu0 0.0
    %1198 = vmatpush.msra.mxu0 0.0
    %1199 = vmatpush.msra.mxu0 0.0
    %1200 = vmatpush.msra.mxu0 %v1036
    %1201 = vmatpush.msra.mxu0 %v1033
    %1202 = vmatpush.msra.mxu0 %v1030
    %1203 = vmatpush.msra.mxu0 %v1027
    %1204 = vmatpush.msra.mxu0 %v1024
    %1205 = vmatpush.msra.mxu0 %v1021
    %1206 = vmatpush.msra.mxu0 %v1018
    %1207 = vmatpush.msra.mxu0 %v1015
    %1208 = vmatmul.f32.gmra.mxu0 %v1169
    %v1209 = vpop.f32.mrf.mxu0
    %v1210 = vadd.f32 0.0, %v1209
    %1211 = vmatmul.f32.gmra.mxu0 %v1172
    %v1212 = vpop.f32.mrf.mxu0
    %v1213 = vadd.f32 0.0, %v1212
    %1214 = vmatmul.f32.gmra.mxu0 %v1175
    %v1215 = vpop.f32.mrf.mxu0
    %v1216 = vadd.f32 0.0, %v1215
    %1217 = vmatmul.f32.gmra.mxu0 %v1178
    %v1218 = vpop.f32.mrf.mxu0
    %v1219 = vadd.f32 0.0, %v1218
    %1220 = vmatmul.f32.gmra.mxu0 %v1181
    %v1221 = vpop.f32.mrf.mxu0
    %v1222 = vadd.f32 0.0, %v1221
    %1223 = vmatmul.f32.gmra.mxu0 %v1184
    %v1224 = vpop.f32.mrf.mxu0
    %v1225 = vadd.f32 0.0, %v1224
    %1226 = vmatmul.f32.gmra.mxu0 %v1187
    %v1227 = vpop.f32.mrf.mxu0
    %v1228 = vadd.f32 0.0, %v1227
    %1229 = vmatmul.f32.gmra.mxu0 %v1190
    %v1230 = vpop.f32.mrf.mxu0
    %v1231 = vadd.f32 0.0, %v1230
    %1232 = vdwg.mxu0
    %1233 = vmatpush.msra.mxu0 0.0
    %1234 = vmatpush.msra.mxu0 0.0
    %1235 = vmatpush.msra.mxu0 0.0
    %1236 = vmatpush.msra.mxu0 0.0
    %1237 = vmatpush.msra.mxu0 0.0
    %1238 = vmatpush.msra.mxu0 0.0
    %1239 = vmatpush.msra.mxu0 0.0
    %1240 = vmatpush.msra.mxu0 0.0
    %1241 = vmatpush.msra.mxu0 %v1158
    %1242 = vmatpush.msra.mxu0 %v1155
    %1243 = vmatpush.msra.mxu0 %v1152
    %1244 = vmatpush.msra.mxu0 %v1149
    %1245 = vmatpush.msra.mxu0 %v1146
    %1246 = vmatpush.msra.mxu0 %v1143
    %1247 = vmatpush.msra.mxu0 %v1140
    %1248 = vmatpush.msra.mxu0 %v1137
    %1249 = vmatmul.f32.gmra.mxu0 %v1169
    %v1250 = vpop.f32.mrf.mxu0
    %v1251 = vadd.f32 0.0, %v1250
    %1252 = vmatmul.f32.gmra.mxu0 %v1172
    %v1253 = vpop.f32.mrf.mxu0
    %v1254 = vadd.f32 0.0, %v1253
    %1255 = vmatmul.f32.gmra.mxu0 %v1175
    %v1256 = vpop.f32.mrf.mxu0
    %v1257 = vadd.f32 0.0, %v1256
    %1258 = vmatmul.f32.gmra.mxu0 %v1178
    %v1259 = vpop.f32.mrf.mxu0
    %v1260 = vadd.f32 0.0, %v1259
    %1261 = vmatmul.f32.gmra.mxu0 %v1181
    %v1262 = vpop.f32.mrf.mxu0
    %v1263 = vadd.f32 0.0, %v1262
    %1264 = vmatmul.f32.gmra.mxu0 %v1184
    %v1265 = vpop.f32.mrf.mxu0
    %v1266 = vadd.f32 0.0, %v1265
    %1267 = vmatmul.f32.gmra.mxu0 %v1187
    %v1268 = vpop.f32.mrf.mxu0
    %v1269 = vadd.f32 0.0, %v1268
    %1270 = vmatmul.f32.gmra.mxu0 %v1190
    %v1271 = vpop.f32.mrf.mxu0
    %v1272 = vadd.f32 0.0, %v1271
    %1273 = vdwg.mxu0
    %v1274 = vmul.f32 %v1210, %v1210
    %v1275 = vmul.f32 %v1213, %v1213
    %v1276 = vmul.f32 %v1216, %v1216
    %v1277 = vmul.f32 %v1219, %v1219
    %v1278 = vmul.f32 %v1222, %v1222
    %v1279 = vmul.f32 %v1225, %v1225
    %v1280 = vmul.f32 %v1228, %v1228
    %v1281 = vmul.f32 %v1231, %v1231
    %v1282 = vsub.f32 %v1251, %v1274
    %v1283 = vsub.f32 %v1254, %v1275
    %v1284 = vsub.f32 %v1257, %v1276
    %v1285 = vsub.f32 %v1260, %v1277
    %v1286 = vsub.f32 %v1263, %v1278
    %v1287 = vsub.f32 %v1266, %v1279
    %v1288 = vsub.f32 %v1269, %v1280
    %v1289 = vsub.f32 %v1272, %v1281
    %v1290 = vmax.f32 %v1282, 0.0
    %v1291 = vmax.f32 %v1283, 0.0
    %v1292 = vmax.f32 %v1284, 0.0
    %v1293 = vmax.f32 %v1285, 0.0
    %v1294 = vmax.f32 %v1286, 0.0
    %v1295 = vmax.f32 %v1287, 0.0
    %v1296 = vmax.f32 %v1288, 0.0
    %v1297 = vmax.f32 %v1289, 0.0
    %v1298 = vadd.f32 %v1290, 1e-05
    %v1299 = vadd.f32 %v1291, 1e-05
    %v1300 = vadd.f32 %v1292, 1e-05
    %v1301 = vadd.f32 %v1293, 1e-05
    %v1302 = vadd.f32 %v1294, 1e-05
    %v1303 = vadd.f32 %v1295, 1e-05
    %v1304 = vadd.f32 %v1296, 1e-05
    %v1305 = vadd.f32 %v1297, 1e-05
    %v1306 = vrsqrt.pop %v1298
    %v1307 = vmul.f32 %v1306, %v1298
    %v1308 = vmul.f32 %v1307, %v1306
    %v1309 = vmul.f32 0.5, %v1308
    %v1310 = vsub.f32 1.5, %v1309
    %v1311 = vmul.f32 %v1306, %v1310
    %vm1312 = vweird.f32 %v1298
    %vm1313 = vweird.f32 %v1306
    %vm1314 = vmor %vm1312, %vm1313
    %v1315 = vsel %vm1314, %v1306, %v1311
    %v1316 = vrsqrt.pop %v1299
    %v1317 = vmul.f32 %v1316, %v1299
    %v1318 = vmul.f32 %v1317, %v1316
    %v1319 = vmul.f32 0.5, %v1318
    %v1320 = vsub.f32 1.5, %v1319
    %v1321 = vmul.f32 %v1316, %v1320
    %vm1322 = vweird.f32 %v1299
    %vm1323 = vweird.f32 %v1316
    %vm1324 = vmor %vm1322, %vm1323
    %v1325 = vsel %vm1324, %v1316, %v1321
    %v1326 = vrsqrt.pop %v1300
    %v1327 = vmul.f32 %v1326, %v1300
    %v1328 = vmul.f32 %v1327, %v1326
    %v1329 = vmul.f32 0.5, %v1328
    %v1330 = vsub.f32 1.5, %v1329
    %v1331 = vmul.f32 %v1326, %v1330
    %vm1332 = vweird.f32 %v1300
    %vm1333 = vweird.f32 %v1326
    %vm1334 = vmor %vm1332, %vm1333
    %v1335 = vsel %vm1334, %v1326, %v1331
    %v1336 = vrsqrt.pop %v1301
    %v1337 = vmul.f32 %v1336, %v1301
    %v1338 = vmul.f32 %v1337, %v1336
    %v1339 = vmul.f32 0.5, %v1338
    %v1340 = vsub.f32 1.5, %v1339
    %v1341 = vmul.f32 %v1336, %v1340
    %vm1342 = vweird.f32 %v1301
    %vm1343 = vweird.f32 %v1336
    %vm1344 = vmor %vm1342, %vm1343
    %v1345 = vsel %vm1344, %v1336, %v1341
    %v1346 = vrsqrt.pop %v1302
    %v1347 = vmul.f32 %v1346, %v1302
    %v1348 = vmul.f32 %v1347, %v1346
    %v1349 = vmul.f32 0.5, %v1348
    %v1350 = vsub.f32 1.5, %v1349
    %v1351 = vmul.f32 %v1346, %v1350
    %vm1352 = vweird.f32 %v1302
    %vm1353 = vweird.f32 %v1346
    %vm1354 = vmor %vm1352, %vm1353
    %v1355 = vsel %vm1354, %v1346, %v1351
    %v1356 = vrsqrt.pop %v1303
    %v1357 = vmul.f32 %v1356, %v1303
    %v1358 = vmul.f32 %v1357, %v1356
    %v1359 = vmul.f32 0.5, %v1358
    %v1360 = vsub.f32 1.5, %v1359
    %v1361 = vmul.f32 %v1356, %v1360
    %vm1362 = vweird.f32 %v1303
    %vm1363 = vweird.f32 %v1356
    %vm1364 = vmor %vm1362, %vm1363
    %v1365 = vsel %vm1364, %v1356, %v1361
    %v1366 = vrsqrt.pop %v1304
    %v1367 = vmul.f32 %v1366, %v1304
    %v1368 = vmul.f32 %v1367, %v1366
    %v1369 = vmul.f32 0.5, %v1368
    %v1370 = vsub.f32 1.5, %v1369
    %v1371 = vmul.f32 %v1366, %v1370
    %vm1372 = vweird.f32 %v1304
    %vm1373 = vweird.f32 %v1366
    %vm1374 = vmor %vm1372, %vm1373
    %v1375 = vsel %vm1374, %v1366, %v1371
    %v1376 = vrsqrt.pop %v1305
    %v1377 = vmul.f32 %v1376, %v1305
    %v1378 = vmul.f32 %v1377, %v1376
    %v1379 = vmul.f32 0.5, %v1378
    %v1380 = vsub.f32 1.5, %v1379
    %v1381 = vmul.f32 %v1376, %v1380
    %vm1382 = vweird.f32 %v1305
    %vm1383 = vweird.f32 %v1376
    %vm1384 = vmor %vm1382, %vm1383
    %v1385 = vsel %vm1384, %v1376, %v1381
    %v1386 = vld [vmem:[%s5] sm:$0xff]
    %v1387 = vld [vmem:[%s5 + $0x8] sm:$0xff]
    %v1388 = vld [vmem:[%s5 + $0x10] sm:$0xff]
    %v1389 = vld [vmem:[%s5 + $0x18] sm:$0xff]
    %v1390 = vld [vmem:[%s5 + $0x20] sm:$0xff]
    %v1391 = vld [vmem:[%s5 + $0x28] sm:$0xff]
    %v1392 = vld [vmem:[%s5 + $0x30] sm:$0xff]
    %v1393 = vld [vmem:[%s5 + $0x38] sm:$0xff]
    %1395 = vset.pattern.permute.xlu0 0
    %1396 = vperm.xlu0 %1395, %v1386
    %v1397 = vpop.permute.xlu0 %1396
    %1400 = vset.pattern.permute.xlu0 0
    %1401 = vperm.xlu0 %1400, %v1387
    %v1402 = vpop.permute.xlu0 %1401
    %1405 = vset.pattern.permute.xlu0 0
    %1406 = vperm.xlu0 %1405, %v1388
    %v1407 = vpop.permute.xlu0 %1406
    %1410 = vset.pattern.permute.xlu0 0
    %1411 = vperm.xlu0 %1410, %v1389
    %v1412 = vpop.permute.xlu0 %1411
    %1415 = vset.pattern.permute.xlu0 0
    %1416 = vperm.xlu0 %1415, %v1390
    %v1417 = vpop.permute.xlu0 %1416
    %1420 = vset.pattern.permute.xlu0 0
    %1421 = vperm.xlu0 %1420, %v1391
    %v1422 = vpop.permute.xlu0 %1421
    %1425 = vset.pattern.permute.xlu0 0
    %1426 = vperm.xlu0 %1425, %v1392
    %v1427 = vpop.permute.xlu0 %1426
    %1430 = vset.pattern.permute.xlu0 0
    %1431 = vperm.xlu0 %1430, %v1393
    %v1432 = vpop.permute.xlu0 %1431
    %v1434 = vmul.f32 %v1397, %v1315
    %v1435 = vmul.f32 %v1402, %v1325
    %v1436 = vmul.f32 %v1407, %v1335
    %v1437 = vmul.f32 %v1412, %v1345
    %v1438 = vmul.f32 %v1417, %v1355
    %v1439 = vmul.f32 %v1422, %v1365
    %v1440 = vmul.f32 %v1427, %v1375
    %v1441 = vmul.f32 %v1432, %v1385
    %v1442 = vld [vmem:[%s6] sm:$0xff]
    %v1443 = vld [vmem:[%s6 + $0x8] sm:$0xff]
    %v1444 = vld [vmem:[%s6 + $0x10] sm:$0xff]
    %v1445 = vld [vmem:[%s6 + $0x18] sm:$0xff]
    %v1446 = vld [vmem:[%s6 + $0x20] sm:$0xff]
    %v1447 = vld [vmem:[%s6 + $0x28] sm:$0xff]
    %v1448 = vld [vmem:[%s6 + $0x30] sm:$0xff]
    %v1449 = vld [vmem:[%s6 + $0x38] sm:$0xff]
    %v1450 = vmul.f32 %v1434, %v1210
    %v1451 = vmul.f32 %v1435, %v1213
    %v1452 = vmul.f32 %v1436, %v1216
    %v1453 = vmul.f32 %v1437, %v1219
    %v1454 = vmul.f32 %v1438, %v1222
    %v1455 = vmul.f32 %v1439, %v1225
    %v1456 = vmul.f32 %v1440, %v1228
    %v1457 = vmul.f32 %v1441, %v1231
    %1459 = vset.pattern.permute.xlu0 0
    %1460 = vperm.xlu0 %1459, %v1442
    %v1461 = vpop.permute.xlu0 %1460
    %1464 = vset.pattern.permute.xlu0 0
    %1465 = vperm.xlu0 %1464, %v1443
    %v1466 = vpop.permute.xlu0 %1465
    %1469 = vset.pattern.permute.xlu0 0
    %1470 = vperm.xlu0 %1469, %v1444
    %v1471 = vpop.permute.xlu0 %1470
    %1474 = vset.pattern.permute.xlu0 0
    %1475 = vperm.xlu0 %1474, %v1445
    %v1476 = vpop.permute.xlu0 %1475
    %1479 = vset.pattern.permute.xlu0 0
    %1480 = vperm.xlu0 %1479, %v1446
    %v1481 = vpop.permute.xlu0 %1480
    %1484 = vset.pattern.permute.xlu0 0
    %1485 = vperm.xlu0 %1484, %v1447
    %v1486 = vpop.permute.xlu0 %1485
    %1489 = vset.pattern.permute.xlu0 0
    %1490 = vperm.xlu0 %1489, %v1448
    %v1491 = vpop.permute.xlu0 %1490
    %1494 = vset.pattern.permute.xlu0 0
    %1495 = vperm.xlu0 %1494, %v1449
    %v1496 = vpop.permute.xlu0 %1495
    %v1498 = vsub.f32 %v1461, %v1450
    %v1499 = vsub.f32 %v1466, %v1451
    %v1500 = vsub.f32 %v1471, %v1452
    %v1501 = vsub.f32 %v1476, %v1453
    %v1502 = vsub.f32 %v1481, %v1454
    %v1503 = vsub.f32 %v1486, %v1455
    %v1504 = vsub.f32 %v1491, %v1456
    %v1505 = vsub.f32 %v1496, %v1457
    %v1506 = vld [vmem:[#allocation2] sm:$0xf]
    %1508 = vst [vmem:[#allocation1] ss:$4 sm:$0xff] %v1506
    %v1509 = vld.sshfl [vmem:[#allocation1] sm:$0xff pattern:$0x73625140]
    %v1510 = vld.sshfl [vmem:[#allocation1 + $0x8] sm:$0xff pattern:$0x73625140]
    %vm1511 = vcmask 15360
    %v1513 = vsel %vm1511, %v1434, 0
    %v1516 = vsel %vm1511, %v1435, 0
    %v1519 = vsel %vm1511, %v1436, 0
    %v1522 = vsel %vm1511, %v1437, 0
    %v1525 = vsel %vm1511, %v1438, 0
    %v1528 = vsel %vm1511, %v1439, 0
    %v1531 = vsel %vm1511, %v1440, 0
    %v1534 = vsel %vm1511, %v1441, 0
    %vm1536 = vcmask 1041408
    %v1537 = vsel %vm1536, %v1509, 0
    %v1539 = vsel %vm1536, %v1510, 0
    %1541 = vmatpush.msra.mxu0 0.0
    %1542 = vmatpush.msra.mxu0 0.0
    %1543 = vmatpush.msra.mxu0 0.0
    %1544 = vmatpush.msra.mxu0 0.0
    %1545 = vmatpush.msra.mxu0 0.0
    %1546 = vmatpush.msra.mxu0 0.0
    %1547 = vmatpush.msra.mxu0 0.0
    %1548 = vmatpush.msra.mxu0 0.0
    %1549 = vmatpush.msra.mxu0 0.0
    %1550 = vmatpush.msra.mxu0 0.0
    %1551 = vmatpush.msra.mxu0 0.0
    %1552 = vmatpush.msra.mxu0 0.0
    %1553 = vmatpush.msra.mxu0 0.0
    %1554 = vmatpush.msra.mxu0 0.0
    %1555 = vmatpush.msra.mxu0 0.0
    %1556 = vmatpush.msra.mxu0 %v1537
    %1557 = vmatmul.f32.gmra.mxu0 %v1513
    %v1558 = vpop.f32.mrf.mxu0
    %v1559 = vadd.f32 0.0, %v1558
    %1560 = vmatmul.f32.gmra.mxu0 %v1516
    %v1561 = vpop.f32.mrf.mxu0
    %v1562 = vadd.f32 0.0, %v1561
    %1563 = vmatmul.f32.gmra.mxu0 %v1519
    %v1564 = vpop.f32.mrf.mxu0
    %v1565 = vadd.f32 0.0, %v1564
    %1566 = vmatmul.f32.gmra.mxu0 %v1522
    %v1567 = vpop.f32.mrf.mxu0
    %v1568 = vadd.f32 0.0, %v1567
    %1569 = vmatmul.f32.gmra.mxu0 %v1525
    %v1570 = vpop.f32.mrf.mxu0
    %v1571 = vadd.f32 0.0, %v1570
    %1572 = vmatmul.f32.gmra.mxu0 %v1528
    %v1573 = vpop.f32.mrf.mxu0
    %v1574 = vadd.f32 0.0, %v1573
    %1575 = vmatmul.f32.gmra.mxu0 %v1531
    %v1576 = vpop.f32.mrf.mxu0
    %v1577 = vadd.f32 0.0, %v1576
    %1578 = vmatmul.f32.gmra.mxu0 %v1534
    %v1579 = vpop.f32.mrf.mxu0
    %v1580 = vadd.f32 0.0, %v1579
    %1581 = vdwg.mxu0
    %1582 = vmatpush.msra.mxu0 0.0
    %1583 = vmatpush.msra.mxu0 0.0
    %1584 = vmatpush.msra.mxu0 0.0
    %1585 = vmatpush.msra.mxu0 0.0
    %1586 = vmatpush.msra.mxu0 0.0
    %1587 = vmatpush.msra.mxu0 0.0
    %1588 = vmatpush.msra.mxu0 0.0
    %1589 = vmatpush.msra.mxu0 0.0
    %1590 = vmatpush.msra.mxu0 0.0
    %1591 = vmatpush.msra.mxu0 0.0
    %1592 = vmatpush.msra.mxu0 0.0
    %1593 = vmatpush.msra.mxu0 0.0
    %1594 = vmatpush.msra.mxu0 0.0
    %1595 = vmatpush.msra.mxu0 0.0
    %1596 = vmatpush.msra.mxu0 0.0
    %1597 = vmatpush.msra.mxu0 %v1539
    %1598 = vmatmul.f32.gmra.mxu0 %v1513
    %v1599 = vpop.f32.mrf.mxu0
    %v1600 = vadd.f32 0.0, %v1599
    %1601 = vmatmul.f32.gmra.mxu0 %v1516
    %v1602 = vpop.f32.mrf.mxu0
    %v1603 = vadd.f32 0.0, %v1602
    %1604 = vmatmul.f32.gmra.mxu0 %v1519
    %v1605 = vpop.f32.mrf.mxu0
    %v1606 = vadd.f32 0.0, %v1605
    %1607 = vmatmul.f32.gmra.mxu0 %v1522
    %v1608 = vpop.f32.mrf.mxu0
    %v1609 = vadd.f32 0.0, %v1608
    %1610 = vmatmul.f32.gmra.mxu0 %v1525
    %v1611 = vpop.f32.mrf.mxu0
    %v1612 = vadd.f32 0.0, %v1611
    %1613 = vmatmul.f32.gmra.mxu0 %v1528
    %v1614 = vpop.f32.mrf.mxu0
    %v1615 = vadd.f32 0.0, %v1614
    %1616 = vmatmul.f32.gmra.mxu0 %v1531
    %v1617 = vpop.f32.mrf.mxu0
    %v1618 = vadd.f32 0.0, %v1617
    %1619 = vmatmul.f32.gmra.mxu0 %v1534
    %v1620 = vpop.f32.mrf.mxu0
    %v1621 = vadd.f32 0.0, %v1620
    %1622 = vdwg.mxu0
    %1623 = vst [vmem:[#allocation1] ss:$4 sm:$0xff] %v1506
    %v1624 = vld.sshfl [vmem:[#allocation1] sm:$0xff pattern:$0x73625140]
    %v1625 = vld.sshfl [vmem:[#allocation1 + $0x8] sm:$0xff pattern:$0x73625140]
    %v1627 = vsel %vm1511, %v1498, 0
    %v1630 = vsel %vm1511, %v1499, 0
    %v1633 = vsel %vm1511, %v1500, 0
    %v1636 = vsel %vm1511, %v1501, 0
    %v1639 = vsel %vm1511, %v1502, 0
    %v1642 = vsel %vm1511, %v1503, 0
    %v1645 = vsel %vm1511, %v1504, 0
    %v1648 = vsel %vm1511, %v1505, 0
    %v1650 = vsel %vm1536, %v1624, 0
    %v1652 = vsel %vm1536, %v1625, 0
    %1654 = vmatpush.msra.mxu0 0.0
    %1655 = vmatpush.msra.mxu0 0.0
    %1656 = vmatpush.msra.mxu0 0.0
    %1657 = vmatpush.msra.mxu0 0.0
    %1658 = vmatpush.msra.mxu0 0.0
    %1659 = vmatpush.msra.mxu0 0.0
    %1660 = vmatpush.msra.mxu0 0.0
    %1661 = vmatpush.msra.mxu0 0.0
    %1662 = vmatpush.msra.mxu0 0.0
    %1663 = vmatpush.msra.mxu0 0.0
    %1664 = vmatpush.msra.mxu0 0.0
    %1665 = vmatpush.msra.mxu0 0.0
    %1666 = vmatpush.msra.mxu0 0.0
    %1667 = vmatpush.msra.mxu0 0.0
    %1668 = vmatpush.msra.mxu0 0.0
    %1669 = vmatpush.msra.mxu0 %v1650
    %1670 = vmatmul.f32.gmra.mxu0 %v1627
    %v1671 = vpop.f32.mrf.mxu0
    %v1672 = vadd.f32 0.0, %v1671
    %1673 = vmatmul.f32.gmra.mxu0 %v1630
    %v1674 = vpop.f32.mrf.mxu0
    %v1675 = vadd.f32 0.0, %v1674
    %1676 = vmatmul.f32.gmra.mxu0 %v1633
    %v1677 = vpop.f32.mrf.mxu0
    %v1678 = vadd.f32 0.0, %v1677
    %1679 = vmatmul.f32.gmra.mxu0 %v1636
    %v1680 = vpop.f32.mrf.mxu0
    %v1681 = vadd.f32 0.0, %v1680
    %1682 = vmatmul.f32.gmra.mxu0 %v1639
    %v1683 = vpop.f32.mrf.mxu0
    %v1684 = vadd.f32 0.0, %v1683
    %1685 = vmatmul.f32.gmra.mxu0 %v1642
    %v1686 = vpop.f32.mrf.mxu0
    %v1687 = vadd.f32 0.0, %v1686
    %1688 = vmatmul.f32.gmra.mxu0 %v1645
    %v1689 = vpop.f32.mrf.mxu0
    %v1690 = vadd.f32 0.0, %v1689
    %1691 = vmatmul.f32.gmra.mxu0 %v1648
    %v1692 = vpop.f32.mrf.mxu0
    %v1693 = vadd.f32 0.0, %v1692
    %1694 = vdwg.mxu0
    %1695 = vmatpush.msra.mxu0 0.0
    %1696 = vmatpush.msra.mxu0 0.0
    %1697 = vmatpush.msra.mxu0 0.0
    %1698 = vmatpush.msra.mxu0 0.0
    %1699 = vmatpush.msra.mxu0 0.0
    %1700 = vmatpush.msra.mxu0 0.0
    %1701 = vmatpush.msra.mxu0 0.0
    %1702 = vmatpush.msra.mxu0 0.0
    %1703 = vmatpush.msra.mxu0 0.0
    %1704 = vmatpush.msra.mxu0 0.0
    %1705 = vmatpush.msra.mxu0 0.0
    %1706 = vmatpush.msra.mxu0 0.0
    %1707 = vmatpush.msra.mxu0 0.0
    %1708 = vmatpush.msra.mxu0 0.0
    %1709 = vmatpush.msra.mxu0 0.0
    %1710 = vmatpush.msra.mxu0 %v1652
    %1711 = vmatmul.f32.gmra.mxu0 %v1627
    %v1712 = vpop.f32.mrf.mxu0
    %v1713 = vadd.f32 0.0, %v1712
    %1714 = vmatmul.f32.gmra.mxu0 %v1630
    %v1715 = vpop.f32.mrf.mxu0
    %v1716 = vadd.f32 0.0, %v1715
    %1717 = vmatmul.f32.gmra.mxu0 %v1633
    %v1718 = vpop.f32.mrf.mxu0
    %v1719 = vadd.f32 0.0, %v1718
    %1720 = vmatmul.f32.gmra.mxu0 %v1636
    %v1721 = vpop.f32.mrf.mxu0
    %v1722 = vadd.f32 0.0, %v1721
    %1723 = vmatmul.f32.gmra.mxu0 %v1639
    %v1724 = vpop.f32.mrf.mxu0
    %v1725 = vadd.f32 0.0, %v1724
    %1726 = vmatmul.f32.gmra.mxu0 %v1642
    %v1727 = vpop.f32.mrf.mxu0
    %v1728 = vadd.f32 0.0, %v1727
    %1729 = vmatmul.f32.gmra.mxu0 %v1645
    %v1730 = vpop.f32.mrf.mxu0
    %v1731 = vadd.f32 0.0, %v1730
    %1732 = vmatmul.f32.gmra.mxu0 %v1648
    %v1733 = vpop.f32.mrf.mxu0
    %v1734 = vadd.f32 0.0, %v1733
    %1735 = vdwg.mxu0
    %v1736 = vmul.f32 %v743, %v1559
    %v1737 = vmul.f32 %v888, %v1600
    %v1738 = vmul.f32 %v745, %v1562
    %v1739 = vmul.f32 %v890, %v1603
    %v1740 = vmul.f32 %v748, %v1565
    %v1741 = vmul.f32 %v893, %v1606
    %v1742 = vmul.f32 %v750, %v1568
    %v1743 = vmul.f32 %v895, %v1609
    %v1744 = vmul.f32 %v753, %v1571
    %v1745 = vmul.f32 %v898, %v1612
    %v1746 = vmul.f32 %v755, %v1574
    %v1747 = vmul.f32 %v900, %v1615
    %v1748 = vmul.f32 %v758, %v1577
    %v1749 = vmul.f32 %v903, %v1618
    %v1750 = vmul.f32 %v760, %v1580
    %v1751 = vmul.f32 %v905, %v1621
    %v1752 = vadd.f32 %v1736, %v1672
    %v1753 = vadd.f32 %v1737, %v1713
    %v1754 = vadd.f32 %v1738, %v1675
    %v1755 = vadd.f32 %v1739, %v1716
    %v1756 = vadd.f32 %v1740, %v1678
    %v1757 = vadd.f32 %v1741, %v1719
    %v1758 = vadd.f32 %v1742, %v1681
    %v1759 = vadd.f32 %v1743, %v1722
    %v1760 = vadd.f32 %v1744, %v1684
    %v1761 = vadd.f32 %v1745, %v1725
    %v1762 = vadd.f32 %v1746, %v1687
    %v1763 = vadd.f32 %v1747, %v1728
    %v1764 = vadd.f32 %v1748, %v1690
    %v1765 = vadd.f32 %v1749, %v1731
    %v1766 = vadd.f32 %v1750, %v1693
    %v1767 = vadd.f32 %v1751, %v1734
    %v1768 = vtanh.pop %v1752
    %v1769 = vtanh.pop %v1753
    %v1770 = vtanh.pop %v1754
    %v1771 = vtanh.pop %v1755
    %v1772 = vtanh.pop %v1756
    %v1773 = vtanh.pop %v1757
    %v1774 = vtanh.pop %v1758
    %v1775 = vtanh.pop %v1759
    %v1776 = vtanh.pop %v1760
    %v1777 = vtanh.pop %v1761
    %v1778 = vtanh.pop %v1762
    %v1779 = vtanh.pop %v1763
    %v1780 = vtanh.pop %v1764
    %v1781 = vtanh.pop %v1765
    %v1782 = vtanh.pop %v1766
    %v1783 = vtanh.pop %v1767
    %v1784 = vadd.f32 %v1768, 1.0
    %v1785 = vadd.f32 %v1769, 1.0
    %v1786 = vadd.f32 %v1770, 1.0
    %v1787 = vadd.f32 %v1771, 1.0
    %v1788 = vadd.f32 %v1772, 1.0
    %v1789 = vadd.f32 %v1773, 1.0
    %v1790 = vadd.f32 %v1774, 1.0
    %v1791 = vadd.f32 %v1775, 1.0
    %v1792 = vadd.f32 %v1776, 1.0
    %v1793 = vadd.f32 %v1777, 1.0
    %v1794 = vadd.f32 %v1778, 1.0
    %v1795 = vadd.f32 %v1779, 1.0
    %v1796 = vadd.f32 %v1780, 1.0
    %v1797 = vadd.f32 %v1781, 1.0
    %v1798 = vadd.f32 %v1782, 1.0
    %v1799 = vadd.f32 %v1783, 1.0
    %1800 = vst [vmem:[#allocation5] sm:$0xff] %v1784
    %1801 = vst.msk [vmem:[#allocation5 + $0x8] sm:$0xff] %vm927, %v1785
    %1802 = vst [vmem:[#allocation5 + $0x10] sm:$0xff] %v1786
    %1803 = vst.msk [vmem:[#allocation5 + $0x18] sm:$0xff] %vm927, %v1787
    %1804 = vst [vmem:[#allocation5 + $0x20] sm:$0xff] %v1788
    %1805 = vst.msk [vmem:[#allocation5 + $0x28] sm:$0xff] %vm927, %v1789
    %1806 = vst [vmem:[#allocation5 + $0x30] sm:$0xff] %v1790
    %1807 = vst.msk [vmem:[#allocation5 + $0x38] sm:$0xff] %vm927, %v1791
    %1808 = vst [vmem:[#allocation5 + $0x40] sm:$0xff] %v1792
    %1809 = vst.msk [vmem:[#allocation5 + $0x48] sm:$0xff] %vm927, %v1793
    %1810 = vst [vmem:[#allocation5 + $0x50] sm:$0xff] %v1794
    %1811 = vst.msk [vmem:[#allocation5 + $0x58] sm:$0xff] %vm927, %v1795
    %1812 = vst [vmem:[#allocation5 + $0x60] sm:$0xff] %v1796
    %1813 = vst.msk [vmem:[#allocation5 + $0x68] sm:$0xff] %vm927, %v1797
    %1814 = vst [vmem:[#allocation5 + $0x70] sm:$0xff] %v1798
    %1815 = vst.msk [vmem:[#allocation5 + $0x78] sm:$0xff] %vm927, %v1799
    // Predicated region
    $region34: #{tpu_custom_call.1} parent=1 // pred_check
      _
    $region35: #{tpu_custom_call.1} parent=1 // pred_check_branch
      %1817 = sbr.rel (0) target = $region37
    $region36: #{tpu_custom_call.1} parent=1 // pred_region
      %1819 = vsyncadd [#allocation4], 0
      %s1820 = sshll.u32 [#allocation5], 4
      %s1821 = int_to_ptr.vmem [resolvable:$true] %s1820
      %s1822 = sshll.u32 %s7, 4
      %s1823 = int_to_ptr.hbm [resolvable:$true] %s1822
      %1828 = dma.vmem_to_hbm [thread:$0]  %s1821, 2048, %s1823, [#allocation4], 256, 256, 16
    $region37: #{tpu_custom_call.1} parent=1 // pred_fallthru
      _
    // Predicated region
    $region38: #{tpu_custom_call.1} parent=1 // pred_check
      _
    $region39: #{tpu_custom_call.1} parent=1 // pred_check_branch
      %1830 = sbr.rel (0) target = $region41
    $region40: #{tpu_custom_call.1} parent=1 // pred_region
      %1832 = dma.done [#allocation4], 2048
    $region41: #{tpu_custom_call.1} parent=1 // pred_fallthru
      _
    %1833 = vsyncpa [#allocation3], 1
    %1834 = vsyncpa [#allocation4], 1

</llo_original>
